<compile_context>
chip_gen: v7x
topology: tpu7x:2x2x1
jax: 0.10.0
libtpu: 0.0.40
codegen_flags: <defaults>
</compile_context>

<pallas_src>
from functools import partial

import numpy as np

import jax
import jax.numpy as jnp
from jax import lax
from jax.experimental import pallas as pl
from jax.experimental.pallas import tpu as pltpu


# ----------------------------- static network config ------------------------
RGB = 3          # RGB_CHANNEL
RGBP = 4         # RGB padded to 4 so layer-1 lanes are 32*4 = 128
HD = 8           # HIDDEN_DIM_DISCR
RES = 32         # resolution (the "else" branch of Disc)
SLOPE = 0.2      # LeakyReLU negative slope
EPS = 1e-5       # BatchNorm eps
K = 4            # conv kernel size (all layers)
LANES = 128      # W*C product of every layer's activation layout


# --------------------- stacked weight / fold matrix builders ----------------

def _stacked_weights(w_oihw, w_in, c_pad):
    """(K*w_in*c_pad, ow*oc) for a 4x4 / stride-2 / pad-1 conv.

    Row index  = kh*w_in*c_pad + w*c_pad + c   (matches the in-kernel kh stack)
    Col index  = o_w*oc + o_c
    The kw taps are pre-summed (distinct kw never hit the same (w, o_w) block),
    so the kernel needs a single matmul per conv.
    """
    w_np = np.asarray(w_oihw)
    oc, c_in, _, _ = w_np.shape
    ow = w_in // 2
    m = np.zeros((K * w_in * c_pad, ow * oc), np.float32)
    for kh in range(K):
        for kw in range(K):
            wt = w_np[:, :, kh, kw].T                     # (c_in, oc)
            for o in range(ow):
                w = 2 * o + kw - 1
                if 0 <= w < w_in:
                    r = kh * w_in * c_pad + w * c_pad
                    m[r:r + c_in, o * oc:(o + 1) * oc] = wt
    return jnp.asarray(m)


def _conv4_weights(w_oihw):
    """(K, 1, 4*C) layout matching the (4, N_TILE, 4*C) stage-3 activation."""
    w_np = np.asarray(w_oihw)                             # (1, 32, 4, 4)
    c_in = w_np.shape[1]
    w = np.zeros((K, 1, 4 * c_in), np.float32)
    for kh in range(K):
        for kw in range(4):
            w[kh, 0, kw * c_in:(kw + 1) * c_in] = w_np[0, :, kh, kw]
    return jnp.asarray(w)


def _fold_matrix(ow, oc):
    """0/1 (ow*oc, ow*oc) matrix: per-channel sum over the ow lane groups,
    broadcast back to every lane group (finishes BN stats in-kernel)."""
    return jnp.asarray(np.tile(np.eye(oc, dtype=np.float32), (ow, ow)))


def build_disc_params(key):
    """DCGAN-style init (normal, std=0.02); BN gamma=1, beta=0 (folded later)."""
    ks = jax.random.split(key, 4)
    w1 = 0.02 * jax.random.normal(ks[0], (HD, RGB, K, K), jnp.float32)
    w2 = 0.02 * jax.random.normal(ks[1], (HD * 2, HD, K, K), jnp.float32)
    w3 = 0.02 * jax.random.normal(ks[2], (HD * 4, HD * 2, K, K), jnp.float32)
    w4 = 0.02 * jax.random.normal(ks[3], (1, HD * 4, K, K), jnp.float32)
    params = {
        "M1": _stacked_weights(w1, 32, RGBP),             # (512, 128)
        "M2": _stacked_weights(w2, 16, HD),                # (512, 128)
        "M3": _stacked_weights(w3, 8, HD * 2),             # (512, 128)
        "W4": _conv4_weights(w4),                          # (4, 1, 128)
        "F2": _fold_matrix(8, HD * 2),                     # (128, 128)
        "F3": _fold_matrix(4, HD * 4),                     # (128, 128)
    }
    return params, (w1, w2, w3, w4)


# ----------------------------- in-kernel helpers -----------------------------

def _leaky(x):
    return jnp.where(x > 0, x, SLOPE * x)


def _conv_s2p1(x, m, oh, n_tile):
    """4x4 / stride-2 / pad-1 conv as ONE matmul.

    x: (2*oh, n_tile, 128) activation, lane = w*C + c.
    m: (512, ow*oc) stacked weights (kh along rows, kw pre-summed).
    """
    z = jnp.zeros((1, n_tile, LANES), jnp.float32)
    xp = jnp.concatenate([z, x, z], axis=0)               # zero rows h = -1, h = H
    xr = xp.reshape(oh + 1, 2, n_tile, LANES)             # even/odd padded slabs
    # tap kh needs input row h = 2*o + kh - 1  ==  padded slab 2*o + kh
    stacked = jnp.concatenate(
        [xr[:oh, 0], xr[:oh, 1], xr[1:, 0], xr[1:, 1]], axis=-1)  # (oh, n, 512)
    y = jnp.dot(stacked.reshape(oh * n_tile, 4 * LANES), m,
                preferred_element_type=jnp.float32)
    return y.reshape(oh, n_tile, m.shape[1])


def _masked_stats(y, n_real, n_tile):
    """Per-tile (2, 128) [sum; sumsq]; padded batch entries masked out."""
    i = pl.program_id(0)
    valid = jnp.clip(n_real - i * n_tile, 0, n_tile)
    nidx = lax.broadcasted_iota(jnp.int32, (1, n_tile, LANES), 1)
    ym = y * (nidx < valid).astype(jnp.float32)
    s = ym.sum(axis=0).sum(axis=0, keepdims=True)          # (1, 128)
    q = (ym * ym).sum(axis=0).sum(axis=0, keepdims=True)   # (1, 128)
    return jnp.concatenate([s, q], axis=0)                 # (2, 128)


def _bn_scale_shift(st_all, fold, cnt):
    """Finish the cross-tile BN reduction in-kernel -> per-lane scale/shift."""
    s = jnp.sum(st_all, axis=0)                            # (2, 128)
    s8 = jnp.concatenate([s, jnp.zeros((6, LANES), jnp.float32)], axis=0)
    folded = jnp.dot(s8, fold, preferred_element_type=jnp.float32)
    mean = folded[0:1, :] / cnt
    var = jnp.maximum(folded[1:2, :] / cnt - mean * mean, 0.0)   # biased (training)
    scale = 1.0 / jnp.sqrt(var + EPS)                      # gamma = 1
    return scale, -mean * scale                            # beta = 0


# ------------------------------- Pallas kernels ------------------------------

def _stage1_kernel(x_ref, m1_ref, m2_ref, y2_ref, st_ref, *, n_real, n_tile):
    y1 = _leaky(_conv_s2p1(x_ref[...], m1_ref[...], 16, n_tile))  # conv1 + LeakyReLU
    y2 = _conv_s2p1(y1, m2_ref[...], 8, n_tile)                   # conv2 (pre-BN)
    y2_ref[...] = y2
    st_ref[...] = _masked_stats(y2, n_real, n_tile).reshape(1, 2, LANES)


def _stage2_kernel(y2_ref, st2_ref, f2_ref, m3_ref, y3_ref, st_ref,
                   *, n_real, n_tile, cnt2):
    scale, shift = _bn_scale_shift(st2_ref[...], f2_ref[...], cnt2)
    a = _leaky(y2_ref[...] * scale.reshape(1, 1, LANES)
               + shift.reshape(1, 1, LANES))                       # BN2 + LeakyReLU
    y3 = _conv_s2p1(a, m3_ref[...], 4, n_tile)                     # conv3 (pre-BN)
    y3_ref[...] = y3
    st_ref[...] = _masked_stats(y3, n_real, n_tile).reshape(1, 2, LANES)


def _stage3_kernel(y3_ref, st3_ref, f3_ref, w4_ref, out_ref, *, n_tile, cnt3):
    scale, shift = _bn_scale_shift(st3_ref[...], f3_ref[...], cnt3)
    a = _leaky(y3_ref[...] * scale.reshape(1, 1, LANES)
               + shift.reshape(1, 1, LANES))                       # BN3 + LeakyReLU
    # conv4: 4x4 / stride 1 / pad 0 / 1 output channel -> per-image dot product.
    prod = a * w4_ref[...]                                         # (4,n,128)*(4,1,128)
    y4 = prod.sum(axis=0).sum(axis=1, keepdims=True)               # (n_tile, 1)
    z = jnp.exp(-jnp.abs(y4))                                      # stable sigmoid
    out_ref[...] = jnp.where(y4 >= 0.0, 1.0 / (1.0 + z), z / (1.0 + z))


# ------------------------------ wrapper / glue --------------------------------

def _pick_tile(n):
    """<= 32 images per grid step; keep >= 2 steps when the batch allows (v7x)."""
    t = 32
    while t > 8 and -(-n // t) < 2:
        t //= 2
    return t


def disc_forward(x_nchw, params):
    """Disc forward (training-mode BN): (N, 3, 32, 32) f32 -> (N,) in [0, 1]."""
    n = x_nchw.shape[0]
    n_tile = _pick_tile(n)
    n_pad = -(-n // n_tile) * n_tile
    n_tiles = n_pad // n_tile
    cp = pltpu.CompilerParams(dimension_semantics=("parallel",))

    # NCHW -> (H, N, W*Cpad) lane-dense layout (row = (h, n), lane = w*4 + c).
    x = jnp.pad(x_nchw, ((0, n_pad - n), (0, RGBP - RGB), (0, 0), (0, 0)))
    x3d = jnp.transpose(x, (2, 0, 3, 1)).reshape(RES, n_pad, RES * RGBP)

    const2 = lambda i: (0, 0)
    const3 = lambda i: (0, 0, 0)

    # ---- stage 1: conv1 + leaky + conv2 (+ BN2 partial stats) ----
    y2, st2 = pl.pallas_call(
        partial(_stage1_kernel, n_real=n, n_tile=n_tile),
        grid=(n_tiles,),
        in_specs=(
            pl.BlockSpec((RES, n_tile, LANES), lambda i: (0, i, 0)),
            pl.BlockSpec(params["M1"].shape, const2),
            pl.BlockSpec(params["M2"].shape, const2),
        ),
        out_specs=(
            pl.BlockSpec((8, n_tile, LANES), lambda i: (0, i, 0)),
            pl.BlockSpec((1, 2, LANES), lambda i: (i, 0, 0)),
        ),
        out_shape=(
            jax.ShapeDtypeStruct((8, n_pad, LANES), jnp.float32),
            jax.ShapeDtypeStruct((n_tiles, 2, LANES), jnp.float32),
        ),
        compiler_params=cp,
    )(x3d, params["M1"], params["M2"])

    # ---- stage 2: BN2 + leaky + conv3 (+ BN3 partial stats) ----
    y3, st3 = pl.pallas_call(
        partial(_stage2_kernel, n_real=n, n_tile=n_tile, cnt2=float(n * 8 * 8)),
        grid=(n_tiles,),
        in_specs=(
            pl.BlockSpec((8, n_tile, LANES), lambda i: (0, i, 0)),
            pl.BlockSpec((n_tiles, 2, LANES), const3),
            pl.BlockSpec(params["F2"].shape, const2),
            pl.BlockSpec(params["M3"].shape, const2),
        ),
        out_specs=(
            pl.BlockSpec((4, n_tile, LANES), lambda i: (0, i, 0)),
            pl.BlockSpec((1, 2, LANES), lambda i: (i, 0, 0)),
        ),
        out_shape=(
            jax.ShapeDtypeStruct((4, n_pad, LANES), jnp.float32),
            jax.ShapeDtypeStruct((n_tiles, 2, LANES), jnp.float32),
        ),
        compiler_params=cp,
    )(y2, st2, params["F2"], params["M3"])

    # ---- stage 3: BN3 + leaky + conv4 + sigmoid ----
    out = pl.pallas_call(
        partial(_stage3_kernel, n_tile=n_tile, cnt3=float(n * 4 * 4)),
        grid=(n_tiles,),
        in_specs=(
            pl.BlockSpec((4, n_tile, LANES), lambda i: (0, i, 0)),
            pl.BlockSpec((n_tiles, 2, LANES), const3),
            pl.BlockSpec(params["F3"].shape, const2),
            pl.BlockSpec(params["W4"].shape, const3),
        ),
        out_specs=pl.BlockSpec((n_tile, 1), lambda i: (i, 0)),
        out_shape=jax.ShapeDtypeStruct((n_pad, 1), jnp.float32),
        compiler_params=cp,
    )(y3, st3, params["F3"], params["W4"])

    # .view(-1, 1).squeeze(1), dropping the batch padding
    return out[:n, 0]


# ------------------------------ pure-JAX reference ---------------------------

def disc_reference(x, raw_w):
    def conv(h, w, s, p):
        return lax.conv_general_dilated(
            h, w, (s, s), ((p, p), (p, p)),
            dimension_numbers=("NCHW", "OIHW", "NCHW"))

    def bn(h):
        mean = jnp.mean(h, axis=(0, 2, 3), keepdims=True)
        var = jnp.mean((h - mean) ** 2, axis=(0, 2, 3), keepdims=True)
        return (h - mean) / jnp.sqrt(var + EPS)

    w1, w2, w3, w4 = raw_w
    h = _leaky(conv(x, w1, 2, 1))
    h = _leaky(bn(conv(h, w2, 2, 1)))
    h = _leaky(bn(conv(h, w3, 2, 1)))
    h = jax.nn.sigmoid(conv(h, w4, 1, 0))
    return h.reshape(-1, 1)[:, 0]


# TODO(synk): BatchNorm running-stat (momentum) buffer updates are not modeled;
# they do not affect the training-mode forward output.

if __name__ == "__main__":
    key = jax.random.PRNGKey(0)
    kx, kp = jax.random.split(key)

    N = 2
    x = jax.random.normal(kx, (N, RGB, RES, RES), jnp.float32)
    params, raw_w = build_disc_params(kp)

    out = jax.jit(disc_forward)(x, params)
    out = jax.block_until_ready(out)

    assert out.shape == (N,), out.shape
    assert bool(jnp.all((out >= 0.0) & (out <= 1.0)))

    ref = disc_reference(x, raw_w)
    # tolerance accounts for TPU default-precision (bf16-pass) matmuls on
    # either side; indexing/layout bugs would show up as O(0.1) errors.
    max_err = float(jnp.max(jnp.abs(out - ref)))
    assert max_err < 5e-3, max_err

    print("KERNEL_OK")
</pallas_src>

<mosaic_0001>
module attributes {stable_mosaic.version = 11 : i64} {
  func.func @_stage1_kernel(%arg0: i32, %arg1: memref<32x8x128xf32, #tpu.memory_space<vmem>>, %arg2: memref<512x128xf32, #tpu.memory_space<vmem>>, %arg3: memref<512x128xf32, #tpu.memory_space<vmem>>, %arg4: memref<8x8x128xf32, #tpu.memory_space<vmem>>, %arg5: memref<1x2x128xf32, #tpu.memory_space<vmem>>) attributes {dimension_semantics = [#tpu.dimension_semantics<parallel>], iteration_bounds = array<i64: 1>, scalar_prefetch = 0 : i64, scratch_operands = 0 : i64, tpu.core_type = #tpu.core_type<tc>, window_params = [{transform_indices = @transform_0, window_bounds = array<i64: 32, 8, 128>}, {pipeline_mode = #tpu.pipeline_mode<synchronous>, transform_indices = @transform_1, window_bounds = array<i64: 512, 128>}, {pipeline_mode = #tpu.pipeline_mode<synchronous>, transform_indices = @transform_2, window_bounds = array<i64: 512, 128>}, {transform_indices = @transform_3, window_bounds = array<i64: 8, 8, 128>}, {transform_indices = @transform_4, window_bounds = array<i64: 1, 2, 128>}]} {
    %c0 = arith.constant 0 : index
    %c0_0 = arith.constant 0 : index
    %c0_1 = arith.constant 0 : index
    %0 = vector.load %arg1[%c0, %c0_0, %c0_1] : memref<32x8x128xf32, #tpu.memory_space<vmem>>, vector<32x8x128xf32>
    %c0_2 = arith.constant 0 : index
    %c0_3 = arith.constant 0 : index
    %1 = vector.load %arg2[%c0_2, %c0_3] : memref<512x128xf32, #tpu.memory_space<vmem>>, vector<512x128xf32>
    %cst = arith.constant 0.000000e+00 : f32
    %2 = vector.broadcast %cst : f32 to vector<1x8x128xf32>
    %3 = tpu.concatenate %2, %0, %2 in 0 : vector<1x8x128xf32>, vector<32x8x128xf32>, vector<1x8x128xf32> -> vector<34x8x128xf32>
    %4 = vector.shape_cast %3 : vector<34x8x128xf32> to vector<17x2x8x128xf32>
    %5 = vector.extract_strided_slice %4 {offsets = [0, 0, 0, 0], sizes = [16, 1, 8, 128], strides = [1, 1, 1, 1]} : vector<17x2x8x128xf32> to vector<16x1x8x128xf32>
    %6 = vector.shape_cast %5 : vector<16x1x8x128xf32> to vector<16x8x128xf32>
    %7 = vector.extract_strided_slice %4 {offsets = [0, 1, 0, 0], sizes = [16, 1, 8, 128], strides = [1, 1, 1, 1]} : vector<17x2x8x128xf32> to vector<16x1x8x128xf32>
    %8 = vector.shape_cast %7 : vector<16x1x8x128xf32> to vector<16x8x128xf32>
    %9 = vector.extract_strided_slice %4 {offsets = [1, 0, 0, 0], sizes = [16, 1, 8, 128], strides = [1, 1, 1, 1]} : vector<17x2x8x128xf32> to vector<16x1x8x128xf32>
    %10 = vector.shape_cast %9 : vector<16x1x8x128xf32> to vector<16x8x128xf32>
    %11 = vector.extract_strided_slice %4 {offsets = [1, 1, 0, 0], sizes = [16, 1, 8, 128], strides = [1, 1, 1, 1]} : vector<17x2x8x128xf32> to vector<16x1x8x128xf32>
    %12 = vector.shape_cast %11 : vector<16x1x8x128xf32> to vector<16x8x128xf32>
    %13 = tpu.concatenate %6, %8, %10, %12 in 2 : vector<16x8x128xf32>, vector<16x8x128xf32>, vector<16x8x128xf32>, vector<16x8x128xf32> -> vector<16x8x512xf32>
    %14 = vector.shape_cast %13 : vector<16x8x512xf32> to vector<128x512xf32>
    %cst_4 = arith.constant dense<0.000000e+00> : vector<128x128xf32>
    %15 = tpu.matmul %14, %1, %cst_4 {dimension_numbers = #tpu.dot_dimension_numbers<[1], [0], [0], [1], [0, 0, 1, 1], [], []>} : vector<128x512xf32>, vector<512x128xf32>, vector<128x128xf32> -> vector<128x128xf32>
    %16 = vector.shape_cast %15 : vector<128x128xf32> to vector<16x8x128xf32>
    %cst_5 = arith.constant 0.000000e+00 : f32
    %17 = vector.broadcast %cst_5 : f32 to vector<16x8x128xf32>
    %18 = arith.cmpf ogt, %16, %17 : vector<16x8x128xf32>
    %cst_6 = arith.constant 2.000000e-01 : f32
    %19 = vector.broadcast %cst_6 : f32 to vector<16x8x128xf32>
    %20 = arith.mulf %19, %16 : vector<16x8x128xf32>
    %21 = arith.select %18, %16, %20 : vector<16x8x128xi1>, vector<16x8x128xf32>
    %c0_7 = arith.constant 0 : index
    %c0_8 = arith.constant 0 : index
    %22 = vector.load %arg3[%c0_7, %c0_8] : memref<512x128xf32, #tpu.memory_space<vmem>>, vector<512x128xf32>
    %cst_9 = arith.constant 0.000000e+00 : f32
    %23 = vector.broadcast %cst_9 : f32 to vector<1x8x128xf32>
    %24 = tpu.concatenate %23, %21, %23 in 0 : vector<1x8x128xf32>, vector<16x8x128xf32>, vector<1x8x128xf32> -> vector<18x8x128xf32>
    %25 = vector.shape_cast %24 : vector<18x8x128xf32> to vector<9x2x8x128xf32>
    %26 = vector.extract_strided_slice %25 {offsets = [0, 0, 0, 0], sizes = [8, 1, 8, 128], strides = [1, 1, 1, 1]} : vector<9x2x8x128xf32> to vector<8x1x8x128xf32>
    %27 = vector.shape_cast %26 : vector<8x1x8x128xf32> to vector<8x8x128xf32>
    %28 = vector.extract_strided_slice %25 {offsets = [0, 1, 0, 0], sizes = [8, 1, 8, 128], strides = [1, 1, 1, 1]} : vector<9x2x8x128xf32> to vector<8x1x8x128xf32>
    %29 = vector.shape_cast %28 : vector<8x1x8x128xf32> to vector<8x8x128xf32>
    %30 = vector.extract_strided_slice %25 {offsets = [1, 0, 0, 0], sizes = [8, 1, 8, 128], strides = [1, 1, 1, 1]} : vector<9x2x8x128xf32> to vector<8x1x8x128xf32>
    %31 = vector.shape_cast %30 : vector<8x1x8x128xf32> to vector<8x8x128xf32>
    %32 = vector.extract_strided_slice %25 {offsets = [1, 1, 0, 0], sizes = [8, 1, 8, 128], strides = [1, 1, 1, 1]} : vector<9x2x8x128xf32> to vector<8x1x8x128xf32>
    %33 = vector.shape_cast %32 : vector<8x1x8x128xf32> to vector<8x8x128xf32>
    %34 = tpu.concatenate %27, %29, %31, %33 in 2 : vector<8x8x128xf32>, vector<8x8x128xf32>, vector<8x8x128xf32>, vector<8x8x128xf32> -> vector<8x8x512xf32>
    %35 = vector.shape_cast %34 : vector<8x8x512xf32> to vector<64x512xf32>
    %cst_10 = arith.constant dense<0.000000e+00> : vector<64x128xf32>
    %36 = tpu.matmul %35, %22, %cst_10 {dimension_numbers = #tpu.dot_dimension_numbers<[1], [0], [0], [1], [0, 0, 1, 1], [], []>} : vector<64x512xf32>, vector<512x128xf32>, vector<64x128xf32> -> vector<64x128xf32>
    %37 = vector.shape_cast %36 : vector<64x128xf32> to vector<8x8x128xf32>
    %c0_11 = arith.constant 0 : index
    %c0_12 = arith.constant 0 : index
    %c0_13 = arith.constant 0 : index
    %38 = vector.load %arg4[%c0_11, %c0_12, %c0_13] : memref<8x8x128xf32, #tpu.memory_space<vmem>>, vector<8x8x128xf32>
    tpu.vector_store %arg4[%c0_11, %c0_12, %c0_13], %37 {strides = array<i32>} : memref<8x8x128xf32, #tpu.memory_space<vmem>>, vector<8x8x128xf32>,
    %c8_i32 = arith.constant 8 : i32
    %39 = arith.muli %arg0, %c8_i32 : i32
    %c2_i32 = arith.constant 2 : i32
    %40 = arith.subi %c2_i32, %39 : i32
    %c0_i32 = arith.constant 0 : i32
    %c8_i32_14 = arith.constant 8 : i32
    %41 = arith.maxsi %c0_i32, %40 : i32
    %42 = arith.minsi %c8_i32_14, %41 : i32
    %43 = tpu.iota {dimensions = array<i32: 1>} : vector<1x8x128xi32>
    %44 = vector.broadcast %42 : i32 to vector<1x8x128xi32>
    %45 = arith.cmpi slt, %43, %44 : vector<1x8x128xi32>
    %46 = arith.extui %45 : vector<1x8x128xi1> to vector<1x8x128xi32>
    %47 = arith.sitofp %46 : vector<1x8x128xi32> to vector<1x8x128xf32>
    %48 = vector.broadcast %47 : vector<1x8x128xf32> to vector<8x8x128xf32>
    %49 = arith.mulf %37, %48 : vector<8x8x128xf32>
    %cst_15 = arith.constant dense<0.000000e+00> : vector<8x128xf32>
    %50 = vector.multi_reduction <add>, %49, %cst_15 [0] : vector<8x8x128xf32> to vector<8x128xf32>
    %cst_16 = arith.constant dense<0.000000e+00> : vector<128xf32>
    %51 = vector.multi_reduction <add>, %50, %cst_16 [0] : vector<8x128xf32> to vector<128xf32>
    %52 = vector.shape_cast %51 : vector<128xf32> to vector<1x128xf32>
    %53 = arith.mulf %49, %49 : vector<8x8x128xf32>
    %cst_17 = arith.constant dense<0.000000e+00> : vector<8x128xf32>
    %54 = vector.multi_reduction <add>, %53, %cst_17 [0] : vector<8x8x128xf32> to vector<8x128xf32>
    %cst_18 = arith.constant dense<0.000000e+00> : vector<128xf32>
    %55 = vector.multi_reduction <add>, %54, %cst_18 [0] : vector<8x128xf32> to vector<128xf32>
    %56 = vector.shape_cast %55 : vector<128xf32> to vector<1x128xf32>
    %57 = tpu.concatenate %52, %56 in 0 : vector<1x128xf32>, vector<1x128xf32> -> vector<2x128xf32>
    %58 = vector.shape_cast %57 : vector<2x128xf32> to vector<1x2x128xf32>
    %c0_19 = arith.constant 0 : index
    %c0_20 = arith.constant 0 : index
    %c0_21 = arith.constant 0 : index
    %59 = vector.load %arg5[%c0_19, %c0_20, %c0_21] : memref<1x2x128xf32, #tpu.memory_space<vmem>>, vector<1x2x128xf32>
    tpu.vector_store %arg5[%c0_19, %c0_20, %c0_21], %58 {strides = array<i32>} : memref<1x2x128xf32, #tpu.memory_space<vmem>>, vector<1x2x128xf32>,
    return
  }
  func.func @transform_0(%arg0: i32) -> (i32, i32, i32) {
    %c0_i32 = arith.constant 0 : i32
    %c0_i32_0 = arith.constant 0 : i32
    %c0_i32_1 = arith.constant 0 : i32
    return %c0_i32, %arg0, %c0_i32_0 : i32, i32, i32
  }
  func.func @transform_1(%arg0: i32) -> (i32, i32) {
    %c0_i32 = arith.constant 0 : i32
    %c0_i32_0 = arith.constant 0 : i32
    %c0_i32_1 = arith.constant 0 : i32
    return %c0_i32, %c0_i32_0 : i32, i32
  }
  func.func @transform_2(%arg0: i32) -> (i32, i32) {
    %c0_i32 = arith.constant 0 : i32
    %c0_i32_0 = arith.constant 0 : i32
    %c0_i32_1 = arith.constant 0 : i32
    return %c0_i32, %c0_i32_0 : i32, i32
  }
  func.func @transform_3(%arg0: i32) -> (i32, i32, i32) {
    %c0_i32 = arith.constant 0 : i32
    %c0_i32_0 = arith.constant 0 : i32
    %c0_i32_1 = arith.constant 0 : i32
    return %c0_i32, %arg0, %c0_i32_0 : i32, i32, i32
  }
  func.func @transform_4(%arg0: i32) -> (i32, i32, i32) {
    %c0_i32 = arith.constant 0 : i32
    %c0_i32_0 = arith.constant 0 : i32
    %c0_i32_1 = arith.constant 0 : i32
    return %arg0, %c0_i32, %c0_i32_0 : i32, i32, i32
  }
}

module attributes {stable_mosaic.version = 11 : i64} {
  func.func @_stage2_kernel(%arg0: i32, %arg1: memref<8x8x128xf32, #tpu.memory_space<vmem>>, %arg2: memref<1x2x128xf32, #tpu.memory_space<vmem>>, %arg3: memref<128x128xf32, #tpu.memory_space<vmem>>, %arg4: memref<512x128xf32, #tpu.memory_space<vmem>>, %arg5: memref<4x8x128xf32, #tpu.memory_space<vmem>>, %arg6: memref<1x2x128xf32, #tpu.memory_space<vmem>>) attributes {dimension_semantics = [#tpu.dimension_semantics<parallel>], iteration_bounds = array<i64: 1>, scalar_prefetch = 0 : i64, scratch_operands = 0 : i64, tpu.core_type = #tpu.core_type<tc>, window_params = [{transform_indices = @transform_0, window_bounds = array<i64: 8, 8, 128>}, {pipeline_mode = #tpu.pipeline_mode<synchronous>, transform_indices = @transform_1, window_bounds = array<i64: 1, 2, 128>}, {pipeline_mode = #tpu.pipeline_mode<synchronous>, transform_indices = @transform_2, window_bounds = array<i64: 128, 128>}, {pipeline_mode = #tpu.pipeline_mode<synchronous>, transform_indices = @transform_3, window_bounds = array<i64: 512, 128>}, {transform_indices = @transform_4, window_bounds = array<i64: 4, 8, 128>}, {transform_indices = @transform_5, window_bounds = array<i64: 1, 2, 128>}]} {
    %c0 = arith.constant 0 : index
    %c0_0 = arith.constant 0 : index
    %c0_1 = arith.constant 0 : index
    %0 = vector.load %arg2[%c0, %c0_0, %c0_1] : memref<1x2x128xf32, #tpu.memory_space<vmem>>, vector<1x2x128xf32>
    %c0_2 = arith.constant 0 : index
    %c0_3 = arith.constant 0 : index
    %1 = vector.load %arg3[%c0_2, %c0_3] : memref<128x128xf32, #tpu.memory_space<vmem>>, vector<128x128xf32>
    %cst = arith.constant dense<0.000000e+00> : vector<2x128xf32>
    %2 = vector.multi_reduction <add>, %0, %cst [0] : vector<1x2x128xf32> to vector<2x128xf32>
    %cst_4 = arith.constant 0.000000e+00 : f32
    %3 = vector.broadcast %cst_4 : f32 to vector<6x128xf32>
    %4 = tpu.concatenate %2, %3 in 0 : vector<2x128xf32>, vector<6x128xf32> -> vector<8x128xf32>
    %cst_5 = arith.constant dense<0.000000e+00> : vector<8x128xf32>
    %5 = tpu.matmul %4, %1, %cst_5 {dimension_numbers = #tpu.dot_dimension_numbers<[1], [0], [0], [1], [0, 0, 1, 1], [], []>} : vector<8x128xf32>, vector<128x128xf32>, vector<8x128xf32> -> vector<8x128xf32>
    %6 = vector.extract_strided_slice %5 {offsets = [0, 0], sizes = [1, 128], strides = [1, 1]} : vector<8x128xf32> to vector<1x128xf32>
    %cst_6 = arith.constant 1.280000e+02 : f32
    %7 = vector.broadcast %cst_6 : f32 to vector<1x128xf32>
    %8 = arith.divf %6, %7 : vector<1x128xf32>
    %9 = vector.extract_strided_slice %5 {offsets = [1, 0], sizes = [1, 128], strides = [1, 1]} : vector<8x128xf32> to vector<1x128xf32>
    %cst_7 = arith.constant 1.280000e+02 : f32
    %10 = vector.broadcast %cst_7 : f32 to vector<1x128xf32>
    %11 = arith.divf %9, %10 : vector<1x128xf32>
    %12 = arith.mulf %8, %8 : vector<1x128xf32>
    %13 = arith.subf %11, %12 : vector<1x128xf32>
    %cst_8 = arith.constant 0.000000e+00 : f32
    %14 = vector.broadcast %cst_8 : f32 to vector<1x128xf32>
    %15 = arith.maximumf %13, %14 : vector<1x128xf32>
    %cst_9 = arith.constant 9.99999974E-6 : f32
    %16 = vector.broadcast %cst_9 : f32 to vector<1x128xf32>
    %17 = arith.addf %15, %16 : vector<1x128xf32>
    %18 = math.sqrt %17 : vector<1x128xf32>
    %cst_10 = arith.constant 1.000000e+00 : f32
    %19 = vector.broadcast %cst_10 : f32 to vector<1x128xf32>
    %20 = arith.divf %19, %18 : vector<1x128xf32>
    %cst_11 = arith.constant 0.000000e+00 : f32
    %21 = vector.broadcast %cst_11 : f32 to vector<1x128xf32>
    %22 = arith.subf %21, %8 : vector<1x128xf32>
    %23 = arith.mulf %22, %20 : vector<1x128xf32>
    %c0_12 = arith.constant 0 : index
    %c0_13 = arith.constant 0 : index
    %c0_14 = arith.constant 0 : index
    %24 = vector.load %arg1[%c0_12, %c0_13, %c0_14] : memref<8x8x128xf32, #tpu.memory_space<vmem>>, vector<8x8x128xf32>
    %25 = vector.shape_cast %20 : vector<1x128xf32> to vector<1x1x128xf32>
    %26 = vector.broadcast %25 : vector<1x1x128xf32> to vector<8x8x128xf32>
    %27 = arith.mulf %24, %26 : vector<8x8x128xf32>
    %28 = vector.shape_cast %23 : vector<1x128xf32> to vector<1x1x128xf32>
    %29 = vector.broadcast %28 : vector<1x1x128xf32> to vector<8x8x128xf32>
    %30 = arith.addf %27, %29 : vector<8x8x128xf32>
    %cst_15 = arith.constant 0.000000e+00 : f32
    %31 = vector.broadcast %cst_15 : f32 to vector<8x8x128xf32>
    %32 = arith.cmpf ogt, %30, %31 : vector<8x8x128xf32>
    %cst_16 = arith.constant 2.000000e-01 : f32
    %33 = vector.broadcast %cst_16 : f32 to vector<8x8x128xf32>
    %34 = arith.mulf %33, %30 : vector<8x8x128xf32>
    %35 = arith.select %32, %30, %34 : vector<8x8x128xi1>, vector<8x8x128xf32>
    %c0_17 = arith.constant 0 : index
    %c0_18 = arith.constant 0 : index
    %36 = vector.load %arg4[%c0_17, %c0_18] : memref<512x128xf32, #tpu.memory_space<vmem>>, vector<512x128xf32>
    %cst_19 = arith.constant 0.000000e+00 : f32
    %37 = vector.broadcast %cst_19 : f32 to vector<1x8x128xf32>
    %38 = tpu.concatenate %37, %35, %37 in 0 : vector<1x8x128xf32>, vector<8x8x128xf32>, vector<1x8x128xf32> -> vector<10x8x128xf32>
    %39 = vector.shape_cast %38 : vector<10x8x128xf32> to vector<5x2x8x128xf32>
    %40 = vector.extract_strided_slice %39 {offsets = [0, 0, 0, 0], sizes = [4, 1, 8, 128], strides = [1, 1, 1, 1]} : vector<5x2x8x128xf32> to vector<4x1x8x128xf32>
    %41 = vector.shape_cast %40 : vector<4x1x8x128xf32> to vector<4x8x128xf32>
    %42 = vector.extract_strided_slice %39 {offsets = [0, 1, 0, 0], sizes = [4, 1, 8, 128], strides = [1, 1, 1, 1]} : vector<5x2x8x128xf32> to vector<4x1x8x128xf32>
    %43 = vector.shape_cast %42 : vector<4x1x8x128xf32> to vector<4x8x128xf32>
    %44 = vector.extract_strided_slice %39 {offsets = [1, 0, 0, 0], sizes = [4, 1, 8, 128], strides = [1, 1, 1, 1]} : vector<5x2x8x128xf32> to vector<4x1x8x128xf32>
    %45 = vector.shape_cast %44 : vector<4x1x8x128xf32> to vector<4x8x128xf32>
    %46 = vector.extract_strided_slice %39 {offsets = [1, 1, 0, 0], sizes = [4, 1, 8, 128], strides = [1, 1, 1, 1]} : vector<5x2x8x128xf32> to vector<4x1x8x128xf32>
    %47 = vector.shape_cast %46 : vector<4x1x8x128xf32> to vector<4x8x128xf32>
    %48 = tpu.concatenate %41, %43, %45, %47 in 2 : vector<4x8x128xf32>, vector<4x8x128xf32>, vector<4x8x128xf32>, vector<4x8x128xf32> -> vector<4x8x512xf32>
    %49 = vector.shape_cast %48 : vector<4x8x512xf32> to vector<32x512xf32>
    %cst_20 = arith.constant dense<0.000000e+00> : vector<32x128xf32>
    %50 = tpu.matmul %49, %36, %cst_20 {dimension_numbers = #tpu.dot_dimension_numbers<[1], [0], [0], [1], [0, 0, 1, 1], [], []>} : vector<32x512xf32>, vector<512x128xf32>, vector<32x128xf32> -> vector<32x128xf32>
    %51 = vector.shape_cast %50 : vector<32x128xf32> to vector<4x8x128xf32>
    %c0_21 = arith.constant 0 : index
    %c0_22 = arith.constant 0 : index
    %c0_23 = arith.constant 0 : index
    %52 = vector.load %arg5[%c0_21, %c0_22, %c0_23] : memref<4x8x128xf32, #tpu.memory_space<vmem>>, vector<4x8x128xf32>
    tpu.vector_store %arg5[%c0_21, %c0_22, %c0_23], %51 {strides = array<i32>} : memref<4x8x128xf32, #tpu.memory_space<vmem>>, vector<4x8x128xf32>,
    %c8_i32 = arith.constant 8 : i32
    %53 = arith.muli %arg0, %c8_i32 : i32
    %c2_i32 = arith.constant 2 : i32
    %54 = arith.subi %c2_i32, %53 : i32
    %c0_i32 = arith.constant 0 : i32
    %c8_i32_24 = arith.constant 8 : i32
    %55 = arith.maxsi %c0_i32, %54 : i32
    %56 = arith.minsi %c8_i32_24, %55 : i32
    %57 = tpu.iota {dimensions = array<i32: 1>} : vector<1x8x128xi32>
    %58 = vector.broadcast %56 : i32 to vector<1x8x128xi32>
    %59 = arith.cmpi slt, %57, %58 : vector<1x8x128xi32>
    %60 = arith.extui %59 : vector<1x8x128xi1> to vector<1x8x128xi32>
    %61 = arith.sitofp %60 : vector<1x8x128xi32> to vector<1x8x128xf32>
    %62 = vector.broadcast %61 : vector<1x8x128xf32> to vector<4x8x128xf32>
    %63 = arith.mulf %51, %62 : vector<4x8x128xf32>
    %cst_25 = arith.constant dense<0.000000e+00> : vector<8x128xf32>
    %64 = vector.multi_reduction <add>, %63, %cst_25 [0] : vector<4x8x128xf32> to vector<8x128xf32>
    %cst_26 = arith.constant dense<0.000000e+00> : vector<128xf32>
    %65 = vector.multi_reduction <add>, %64, %cst_26 [0] : vector<8x128xf32> to vector<128xf32>
    %66 = vector.shape_cast %65 : vector<128xf32> to vector<1x128xf32>
    %67 = arith.mulf %63, %63 : vector<4x8x128xf32>
    %cst_27 = arith.constant dense<0.000000e+00> : vector<8x128xf32>
    %68 = vector.multi_reduction <add>, %67, %cst_27 [0] : vector<4x8x128xf32> to vector<8x128xf32>
    %cst_28 = arith.constant dense<0.000000e+00> : vector<128xf32>
    %69 = vector.multi_reduction <add>, %68, %cst_28 [0] : vector<8x128xf32> to vector<128xf32>
    %70 = vector.shape_cast %69 : vector<128xf32> to vector<1x128xf32>
    %71 = tpu.concatenate %66, %70 in 0 : vector<1x128xf32>, vector<1x128xf32> -> vector<2x128xf32>
    %72 = vector.shape_cast %71 : vector<2x128xf32> to vector<1x2x128xf32>
    %c0_29 = arith.constant 0 : index
    %c0_30 = arith.constant 0 : index
    %c0_31 = arith.constant 0 : index
    %73 = vector.load %arg6[%c0_29, %c0_30, %c0_31] : memref<1x2x128xf32, #tpu.memory_space<vmem>>, vector<1x2x128xf32>
    tpu.vector_store %arg6[%c0_29, %c0_30, %c0_31], %72 {strides = array<i32>} : memref<1x2x128xf32, #tpu.memory_space<vmem>>, vector<1x2x128xf32>,
    return
  }
  func.func @transform_0(%arg0: i32) -> (i32, i32, i32) {
    %c0_i32 = arith.constant 0 : i32
    %c0_i32_0 = arith.constant 0 : i32
    %c0_i32_1 = arith.constant 0 : i32
    return %c0_i32, %arg0, %c0_i32_0 : i32, i32, i32
  }
  func.func @transform_1(%arg0: i32) -> (i32, i32, i32) {
    %c0_i32 = arith.constant 0 : i32
    %c0_i32_0 = arith.constant 0 : i32
    %c0_i32_1 = arith.constant 0 : i32
    %c0_i32_2 = arith.constant 0 : i32
    return %c0_i32, %c0_i32_0, %c0_i32_1 : i32, i32, i32
  }
  func.func @transform_2(%arg0: i32) -> (i32, i32) {
    %c0_i32 = arith.constant 0 : i32
    %c0_i32_0 = arith.constant 0 : i32
    %c0_i32_1 = arith.constant 0 : i32
    return %c0_i32, %c0_i32_0 : i32, i32
  }
  func.func @transform_3(%arg0: i32) -> (i32, i32) {
    %c0_i32 = arith.constant 0 : i32
    %c0_i32_0 = arith.constant 0 : i32
    %c0_i32_1 = arith.constant 0 : i32
    return %c0_i32, %c0_i32_0 : i32, i32
  }
  func.func @transform_4(%arg0: i32) -> (i32, i32, i32) {
    %c0_i32 = arith.constant 0 : i32
    %c0_i32_0 = arith.constant 0 : i32
    %c0_i32_1 = arith.constant 0 : i32
    return %c0_i32, %arg0, %c0_i32_0 : i32, i32, i32
  }
  func.func @transform_5(%arg0: i32) -> (i32, i32, i32) {
    %c0_i32 = arith.constant 0 : i32
    %c0_i32_0 = arith.constant 0 : i32
    %c0_i32_1 = arith.constant 0 : i32
    return %arg0, %c0_i32, %c0_i32_0 : i32, i32, i32
  }
}

module attributes {stable_mosaic.version = 11 : i64} {
  func.func @_stage3_kernel(%arg0: i32, %arg1: memref<4x8x128xf32, #tpu.memory_space<vmem>>, %arg2: memref<1x2x128xf32, #tpu.memory_space<vmem>>, %arg3: memref<128x128xf32, #tpu.memory_space<vmem>>, %arg4: memref<4x1x128xf32, #tpu.memory_space<vmem>>, %arg5: memref<8x1xf32, #tpu.memory_space<vmem>>) attributes {dimension_semantics = [#tpu.dimension_semantics<parallel>], iteration_bounds = array<i64: 1>, scalar_prefetch = 0 : i64, scratch_operands = 0 : i64, tpu.core_type = #tpu.core_type<tc>, window_params = [{transform_indices = @transform_0, window_bounds = array<i64: 4, 8, 128>}, {pipeline_mode = #tpu.pipeline_mode<synchronous>, transform_indices = @transform_1, window_bounds = array<i64: 1, 2, 128>}, {pipeline_mode = #tpu.pipeline_mode<synchronous>, transform_indices = @transform_2, window_bounds = array<i64: 128, 128>}, {pipeline_mode = #tpu.pipeline_mode<synchronous>, transform_indices = @transform_3, window_bounds = array<i64: 4, 1, 128>}, {transform_indices = @transform_4, window_bounds = array<i64: 8, 1>}]} {
    %c0 = arith.constant 0 : index
    %c0_0 = arith.constant 0 : index
    %c0_1 = arith.constant 0 : index
    %0 = vector.load %arg2[%c0, %c0_0, %c0_1] : memref<1x2x128xf32, #tpu.memory_space<vmem>>, vector<1x2x128xf32>
    %c0_2 = arith.constant 0 : index
    %c0_3 = arith.constant 0 : index
    %1 = vector.load %arg3[%c0_2, %c0_3] : memref<128x128xf32, #tpu.memory_space<vmem>>, vector<128x128xf32>
    %cst = arith.constant dense<0.000000e+00> : vector<2x128xf32>
    %2 = vector.multi_reduction <add>, %0, %cst [0] : vector<1x2x128xf32> to vector<2x128xf32>
    %cst_4 = arith.constant 0.000000e+00 : f32
    %3 = vector.broadcast %cst_4 : f32 to vector<6x128xf32>
    %4 = tpu.concatenate %2, %3 in 0 : vector<2x128xf32>, vector<6x128xf32> -> vector<8x128xf32>
    %cst_5 = arith.constant dense<0.000000e+00> : vector<8x128xf32>
    %5 = tpu.matmul %4, %1, %cst_5 {dimension_numbers = #tpu.dot_dimension_numbers<[1], [0], [0], [1], [0, 0, 1, 1], [], []>} : vector<8x128xf32>, vector<128x128xf32>, vector<8x128xf32> -> vector<8x128xf32>
    %6 = vector.extract_strided_slice %5 {offsets = [0, 0], sizes = [1, 128], strides = [1, 1]} : vector<8x128xf32> to vector<1x128xf32>
    %cst_6 = arith.constant 3.200000e+01 : f32
    %7 = vector.broadcast %cst_6 : f32 to vector<1x128xf32>
    %8 = arith.divf %6, %7 : vector<1x128xf32>
    %9 = vector.extract_strided_slice %5 {offsets = [1, 0], sizes = [1, 128], strides = [1, 1]} : vector<8x128xf32> to vector<1x128xf32>
    %cst_7 = arith.constant 3.200000e+01 : f32
    %10 = vector.broadcast %cst_7 : f32 to vector<1x128xf32>
    %11 = arith.divf %9, %10 : vector<1x128xf32>
    %12 = arith.mulf %8, %8 : vector<1x128xf32>
    %13 = arith.subf %11, %12 : vector<1x128xf32>
    %cst_8 = arith.constant 0.000000e+00 : f32
    %14 = vector.broadcast %cst_8 : f32 to vector<1x128xf32>
    %15 = arith.maximumf %13, %14 : vector<1x128xf32>
    %cst_9 = arith.constant 9.99999974E-6 : f32
    %16 = vector.broadcast %cst_9 : f32 to vector<1x128xf32>
    %17 = arith.addf %15, %16 : vector<1x128xf32>
    %18 = math.sqrt %17 : vector<1x128xf32>
    %cst_10 = arith.constant 1.000000e+00 : f32
    %19 = vector.broadcast %cst_10 : f32 to vector<1x128xf32>
    %20 = arith.divf %19, %18 : vector<1x128xf32>
    %cst_11 = arith.constant 0.000000e+00 : f32
    %21 = vector.broadcast %cst_11 : f32 to vector<1x128xf32>
    %22 = arith.subf %21, %8 : vector<1x128xf32>
    %23 = arith.mulf %22, %20 : vector<1x128xf32>
    %c0_12 = arith.constant 0 : index
    %c0_13 = arith.constant 0 : index
    %c0_14 = arith.constant 0 : index
    %24 = vector.load %arg1[%c0_12, %c0_13, %c0_14] : memref<4x8x128xf32, #tpu.memory_space<vmem>>, vector<4x8x128xf32>
    %25 = vector.shape_cast %20 : vector<1x128xf32> to vector<1x1x128xf32>
    %26 = vector.broadcast %25 : vector<1x1x128xf32> to vector<4x8x128xf32>
    %27 = arith.mulf %24, %26 : vector<4x8x128xf32>
    %28 = vector.shape_cast %23 : vector<1x128xf32> to vector<1x1x128xf32>
    %29 = vector.broadcast %28 : vector<1x1x128xf32> to vector<4x8x128xf32>
    %30 = arith.addf %27, %29 : vector<4x8x128xf32>
    %cst_15 = arith.constant 0.000000e+00 : f32
    %31 = vector.broadcast %cst_15 : f32 to vector<4x8x128xf32>
    %32 = arith.cmpf ogt, %30, %31 : vector<4x8x128xf32>
    %cst_16 = arith.constant 2.000000e-01 : f32
    %33 = vector.broadcast %cst_16 : f32 to vector<4x8x128xf32>
    %34 = arith.mulf %33, %30 : vector<4x8x128xf32>
    %35 = arith.select %32, %30, %34 : vector<4x8x128xi1>, vector<4x8x128xf32>
    %c0_17 = arith.constant 0 : index
    %c0_18 = arith.constant 0 : index
    %c0_19 = arith.constant 0 : index
    %36 = vector.load %arg4[%c0_17, %c0_18, %c0_19] : memref<4x1x128xf32, #tpu.memory_space<vmem>>, vector<4x1x128xf32>
    %37 = vector.broadcast %36 : vector<4x1x128xf32> to vector<4x8x128xf32>
    %38 = arith.mulf %35, %37 : vector<4x8x128xf32>
    %cst_20 = arith.constant dense<0.000000e+00> : vector<8x128xf32>
    %39 = vector.multi_reduction <add>, %38, %cst_20 [0] : vector<4x8x128xf32> to vector<8x128xf32>
    %cst_21 = arith.constant dense<0.000000e+00> : vector<8xf32>
    %40 = vector.multi_reduction <add>, %39, %cst_21 [1] : vector<8x128xf32> to vector<8xf32>
    %41 = vector.shape_cast %40 : vector<8xf32> to vector<8x1xf32>
    %42 = math.absf %41 : vector<8x1xf32>
    %cst_22 = arith.constant 0.000000e+00 : f32
    %43 = vector.broadcast %cst_22 : f32 to vector<8x1xf32>
    %44 = arith.subf %43, %42 : vector<8x1xf32>
    %45 = math.exp %44 : vector<8x1xf32>
    %cst_23 = arith.constant 0.000000e+00 : f32
    %46 = vector.broadcast %cst_23 : f32 to vector<8x1xf32>
    %47 = arith.cmpf oge, %41, %46 : vector<8x1xf32>
    %cst_24 = arith.constant 1.000000e+00 : f32
    %48 = vector.broadcast %cst_24 : f32 to vector<8x1xf32>
    %49 = arith.addf %48, %45 : vector<8x1xf32>
    %cst_25 = arith.constant 1.000000e+00 : f32
    %50 = vector.broadcast %cst_25 : f32 to vector<8x1xf32>
    %51 = arith.divf %50, %49 : vector<8x1xf32>
    %cst_26 = arith.constant 1.000000e+00 : f32
    %52 = vector.broadcast %cst_26 : f32 to vector<8x1xf32>
    %53 = arith.addf %52, %45 : vector<8x1xf32>
    %54 = arith.divf %45, %53 : vector<8x1xf32>
    %55 = arith.select %47, %51, %54 : vector<8x1xi1>, vector<8x1xf32>
    %c0_27 = arith.constant 0 : index
    %c0_28 = arith.constant 0 : index
    %56 = vector.load %arg5[%c0_27, %c0_28] : memref<8x1xf32, #tpu.memory_space<vmem>>, vector<8x1xf32>
    tpu.vector_store %arg5[%c0_27, %c0_28], %55 {strides = array<i32>} : memref<8x1xf32, #tpu.memory_space<vmem>>, vector<8x1xf32>,
    return
  }
  func.func @transform_0(%arg0: i32) -> (i32, i32, i32) {
    %c0_i32 = arith.constant 0 : i32
    %c0_i32_0 = arith.constant 0 : i32
    %c0_i32_1 = arith.constant 0 : i32
    return %c0_i32, %arg0, %c0_i32_0 : i32, i32, i32
  }
  func.func @transform_1(%arg0: i32) -> (i32, i32, i32) {
    %c0_i32 = arith.constant 0 : i32
    %c0_i32_0 = arith.constant 0 : i32
    %c0_i32_1 = arith.constant 0 : i32
    %c0_i32_2 = arith.constant 0 : i32
    return %c0_i32, %c0_i32_0, %c0_i32_1 : i32, i32, i32
  }
  func.func @transform_2(%arg0: i32) -> (i32, i32) {
    %c0_i32 = arith.constant 0 : i32
    %c0_i32_0 = arith.constant 0 : i32
    %c0_i32_1 = arith.constant 0 : i32
    return %c0_i32, %c0_i32_0 : i32, i32
  }
  func.func @transform_3(%arg0: i32) -> (i32, i32, i32) {
    %c0_i32 = arith.constant 0 : i32
    %c0_i32_0 = arith.constant 0 : i32
    %c0_i32_1 = arith.constant 0 : i32
    %c0_i32_2 = arith.constant 0 : i32
    return %c0_i32, %c0_i32_0, %c0_i32_1 : i32, i32, i32
  }
  func.func @transform_4(%arg0: i32) -> (i32, i32) {
    %c0_i32 = arith.constant 0 : i32
    %c0_i32_0 = arith.constant 0 : i32
    return %arg0, %c0_i32 : i32, i32
  }
}

</mosaic_0001>

<llo_original>
// kernel: disc_forward.3
$region0: #{disc_forward.3}
  #allocation0 [shape = 'u32[]', space=smem, size = 0x4, offset = 0x4, fixed_abs, tag = 'smem constant byte address 0x4 - core index']
  #allocation1 [shape = 'u32[144,128]{1,0:T(1,128)}', space=vmem, size = 0x12000, scoped, tag = 'internal scratch']
  %s0 = inlined_call_operand.vmem [shape: f32[32,8,128], index: 0, kind: input, shape index: {}]
  %s1 = inlined_call_operand.vmem [shape: f32[512,128], index: 1, kind: input, shape index: {}]
  %s2 = inlined_call_operand.vmem [shape: f32[512,128], index: 2, kind: input, shape index: {}]
  %s3 = inlined_call_operand.vmem [shape: f32[8,8,128], index: 3, kind: output, shape index: {0}]
  %s4 = inlined_call_operand.vmem [shape: f32[1,2,128], index: 4, kind: output, shape index: {1}]
  %5 = xla_tuple %s3, %s4
  %s6 = sld [smem:[#allocation0]]
  $region30: #{disc_forward.3} parent=0
    _
  %s8 = ssub.s32 1, %s6
  %s9 = scalar_select 0, %s8, %s6
  // Predicated region
  $region2: #{disc_forward.3} parent=0 // pred_check
    _
  $region3: #{disc_forward.3} parent=0 // pred_check_branch
    %11 = sbr.rel (0) target = $region5
  $region4: #{disc_forward.3} parent=0 // pred_region
    _
  $region5: #{disc_forward.3} parent=0 // pred_fallthru
    _
  // Predicated region
  $region6: #{disc_forward.3} parent=0 // pred_check
    _
  $region7: #{disc_forward.3} parent=0 // pred_check_branch
    %13 = sbr.rel (0) target = $region9
  $region8: #{disc_forward.3} parent=0 // pred_region
    _
  $region9: #{disc_forward.3} parent=0 // pred_fallthru
    _
  // Predicated region
  $region10: #{disc_forward.3} parent=0 // pred_check
    _
  $region11: #{disc_forward.3} parent=0 // pred_check_branch
    %15 = sbr.rel (0) target = $region13
  $region12: #{disc_forward.3} parent=0 // pred_region
    _
  $region13: #{disc_forward.3} parent=0 // pred_fallthru
    _
  %v16 = vld [vmem:[%s0] sm:$0xff]
  %v17 = vld [vmem:[%s0 + $0x8] sm:$0xff]
  %v18 = vld [vmem:[%s0 + $0x10] sm:$0xff]
  %v19 = vld [vmem:[%s0 + $0x18] sm:$0xff]
  %v20 = vld [vmem:[%s0 + $0x20] sm:$0xff]
  %v21 = vld [vmem:[%s0 + $0x28] sm:$0xff]
  %v22 = vld [vmem:[%s0 + $0x30] sm:$0xff]
  %v23 = vld [vmem:[%s0 + $0x38] sm:$0xff]
  %v24 = vld [vmem:[%s0 + $0x40] sm:$0xff]
  %v25 = vld [vmem:[%s0 + $0x48] sm:$0xff]
  %v26 = vld [vmem:[%s0 + $0x50] sm:$0xff]
  %v27 = vld [vmem:[%s0 + $0x58] sm:$0xff]
  %v28 = vld [vmem:[%s0 + $0x60] sm:$0xff]
  %v29 = vld [vmem:[%s0 + $0x68] sm:$0xff]
  %v30 = vld [vmem:[%s0 + $0x70] sm:$0xff]
  %v31 = vld [vmem:[%s0 + $0x78] sm:$0xff]
  %v32 = vld [vmem:[%s0 + $0x80] sm:$0xff]
  %v33 = vld [vmem:[%s0 + $0x88] sm:$0xff]
  %v34 = vld [vmem:[%s0 + $0x90] sm:$0xff]
  %v35 = vld [vmem:[%s0 + $0x98] sm:$0xff]
  %v36 = vld [vmem:[%s0 + $0xa0] sm:$0xff]
  %v37 = vld [vmem:[%s0 + $0xa8] sm:$0xff]
  %v38 = vld [vmem:[%s0 + $0xb0] sm:$0xff]
  %v39 = vld [vmem:[%s0 + $0xb8] sm:$0xff]
  %v40 = vld [vmem:[%s0 + $0xc0] sm:$0xff]
  %v41 = vld [vmem:[%s0 + $0xc8] sm:$0xff]
  %v42 = vld [vmem:[%s0 + $0xd0] sm:$0xff]
  %v43 = vld [vmem:[%s0 + $0xd8] sm:$0xff]
  %v44 = vld [vmem:[%s0 + $0xe0] sm:$0xff]
  %v45 = vld [vmem:[%s0 + $0xe8] sm:$0xff]
  %v46 = vld [vmem:[%s0 + $0xf0] sm:$0xff]
  %v47 = vld [vmem:[%s0 + $0xf8] sm:$0xff]
  %v48 = vld [vmem:[%s1] sm:$0xff]
  %v49 = vld [vmem:[%s1 + $0x8] sm:$0xff]
  %v50 = vld [vmem:[%s1 + $0x10] sm:$0xff]
  %v51 = vld [vmem:[%s1 + $0x18] sm:$0xff]
  %v52 = vld [vmem:[%s1 + $0x20] sm:$0xff]
  %v53 = vld [vmem:[%s1 + $0x28] sm:$0xff]
  %v54 = vld [vmem:[%s1 + $0x30] sm:$0xff]
  %v55 = vld [vmem:[%s1 + $0x38] sm:$0xff]
  %v56 = vld [vmem:[%s1 + $0x40] sm:$0xff]
  %v57 = vld [vmem:[%s1 + $0x48] sm:$0xff]
  %v58 = vld [vmem:[%s1 + $0x50] sm:$0xff]
  %v59 = vld [vmem:[%s1 + $0x58] sm:$0xff]
  %v60 = vld [vmem:[%s1 + $0x60] sm:$0xff]
  %v61 = vld [vmem:[%s1 + $0x68] sm:$0xff]
  %v62 = vld [vmem:[%s1 + $0x70] sm:$0xff]
  %v63 = vld [vmem:[%s1 + $0x78] sm:$0xff]
  %v64 = vld [vmem:[%s1 + $0x80] sm:$0xff]
  %v65 = vld [vmem:[%s1 + $0x88] sm:$0xff]
  %v66 = vld [vmem:[%s1 + $0x90] sm:$0xff]
  %v67 = vld [vmem:[%s1 + $0x98] sm:$0xff]
  %v68 = vld [vmem:[%s1 + $0xa0] sm:$0xff]
  %v69 = vld [vmem:[%s1 + $0xa8] sm:$0xff]
  %v70 = vld [vmem:[%s1 + $0xb0] sm:$0xff]
  %v71 = vld [vmem:[%s1 + $0xb8] sm:$0xff]
  %v72 = vld [vmem:[%s1 + $0xc0] sm:$0xff]
  %v73 = vld [vmem:[%s1 + $0xc8] sm:$0xff]
  %v74 = vld [vmem:[%s1 + $0xd0] sm:$0xff]
  %v75 = vld [vmem:[%s1 + $0xd8] sm:$0xff]
  %v76 = vld [vmem:[%s1 + $0xe0] sm:$0xff]
  %v77 = vld [vmem:[%s1 + $0xe8] sm:$0xff]
  %v78 = vld [vmem:[%s1 + $0xf0] sm:$0xff]
  %v79 = vld [vmem:[%s1 + $0xf8] sm:$0xff]
  %v80 = vld [vmem:[%s1 + $0x100] sm:$0xff]
  %v81 = vld [vmem:[%s1 + $0x108] sm:$0xff]
  %v82 = vld [vmem:[%s1 + $0x110] sm:$0xff]
  %v83 = vld [vmem:[%s1 + $0x118] sm:$0xff]
  %v84 = vld [vmem:[%s1 + $0x120] sm:$0xff]
  %v85 = vld [vmem:[%s1 + $0x128] sm:$0xff]
  %v86 = vld [vmem:[%s1 + $0x130] sm:$0xff]
  %v87 = vld [vmem:[%s1 + $0x138] sm:$0xff]
  %v88 = vld [vmem:[%s1 + $0x140] sm:$0xff]
  %v89 = vld [vmem:[%s1 + $0x148] sm:$0xff]
  %v90 = vld [vmem:[%s1 + $0x150] sm:$0xff]
  %v91 = vld [vmem:[%s1 + $0x158] sm:$0xff]
  %v92 = vld [vmem:[%s1 + $0x160] sm:$0xff]
  %v93 = vld [vmem:[%s1 + $0x168] sm:$0xff]
  %v94 = vld [vmem:[%s1 + $0x170] sm:$0xff]
  %v95 = vld [vmem:[%s1 + $0x178] sm:$0xff]
  %v96 = vld [vmem:[%s1 + $0x180] sm:$0xff]
  %v97 = vld [vmem:[%s1 + $0x188] sm:$0xff]
  %v98 = vld [vmem:[%s1 + $0x190] sm:$0xff]
  %v99 = vld [vmem:[%s1 + $0x198] sm:$0xff]
  %v100 = vld [vmem:[%s1 + $0x1a0] sm:$0xff]
  %v101 = vld [vmem:[%s1 + $0x1a8] sm:$0xff]
  %v102 = vld [vmem:[%s1 + $0x1b0] sm:$0xff]
  %v103 = vld [vmem:[%s1 + $0x1b8] sm:$0xff]
  %v104 = vld [vmem:[%s1 + $0x1c0] sm:$0xff]
  %v105 = vld [vmem:[%s1 + $0x1c8] sm:$0xff]
  %v106 = vld [vmem:[%s1 + $0x1d0] sm:$0xff]
  %v107 = vld [vmem:[%s1 + $0x1d8] sm:$0xff]
  %v108 = vld [vmem:[%s1 + $0x1e0] sm:$0xff]
  %v109 = vld [vmem:[%s1 + $0x1e8] sm:$0xff]
  %v110 = vld [vmem:[%s1 + $0x1f0] sm:$0xff]
  %v111 = vld [vmem:[%s1 + $0x1f8] sm:$0xff]
  %112 = vmatprep.subr.mxu0 0.0
  %113 = vmatpush1.msra.mxu0 %v48
  %114 = vmatprep.subr.mxu0 0.0
  %115 = vmatpush1.msra.mxu0 %v49
  %116 = vmatprep.subr.mxu0 0.0
  %117 = vmatpush1.msra.mxu0 %v50
  %118 = vmatprep.subr.mxu0 0.0
  %119 = vmatpush1.msra.mxu0 %v51
  %120 = vmatprep.subr.mxu0 0.0
  %121 = vmatpush1.msra.mxu0 %v52
  %122 = vmatprep.subr.mxu0 0.0
  %123 = vmatpush1.msra.mxu0 %v53
  %124 = vmatprep.subr.mxu0 0.0
  %125 = vmatpush1.msra.mxu0 %v54
  %126 = vmatprep.subr.mxu0 0.0
  %127 = vmatpush1.msra.mxu0 %v55
  %128 = vmatprep.subr.mxu0 0.0
  %129 = vmatpush1.msra.mxu0 %v56
  %130 = vmatprep.subr.mxu0 0.0
  %131 = vmatpush1.msra.mxu0 %v57
  %132 = vmatprep.subr.mxu0 0.0
  %133 = vmatpush1.msra.mxu0 %v58
  %134 = vmatprep.subr.mxu0 0.0
  %135 = vmatpush1.msra.mxu0 %v59
  %136 = vmatprep.subr.mxu0 0.0
  %137 = vmatpush1.msra.mxu0 %v60
  %138 = vmatprep.subr.mxu0 0.0
  %139 = vmatpush1.msra.mxu0 %v61
  %140 = vmatprep.subr.mxu0 0.0
  %141 = vmatpush1.msra.mxu0 %v62
  %142 = vmatprep.subr.mxu0 0.0
  %143 = vmatpush1.msra.mxu0 %v63
  %144 = vmatprep.subr.mxu0 0.0
  %145 = vmatpush1.msra.mxu0 %v64
  %146 = vmatprep.subr.mxu0 0.0
  %147 = vmatpush1.msra.mxu0 %v65
  %148 = vmatprep.subr.mxu0 0.0
  %149 = vmatpush1.msra.mxu0 %v66
  %150 = vmatprep.subr.mxu0 0.0
  %151 = vmatpush1.msra.mxu0 %v67
  %152 = vmatprep.subr.mxu0 0.0
  %153 = vmatpush1.msra.mxu0 %v68
  %154 = vmatprep.subr.mxu0 0.0
  %155 = vmatpush1.msra.mxu0 %v69
  %156 = vmatprep.subr.mxu0 0.0
  %157 = vmatpush1.msra.mxu0 %v70
  %158 = vmatprep.subr.mxu0 0.0
  %159 = vmatpush1.msra.mxu0 %v71
  %160 = vmatprep.subr.mxu0 0.0
  %161 = vmatpush1.msra.mxu0 %v72
  %162 = vmatprep.subr.mxu0 0.0
  %163 = vmatpush1.msra.mxu0 %v73
  %164 = vmatprep.subr.mxu0 0.0
  %165 = vmatpush1.msra.mxu0 %v74
  %166 = vmatprep.subr.mxu0 0.0
  %167 = vmatpush1.msra.mxu0 %v75
  %168 = vmatprep.subr.mxu0 0.0
  %169 = vmatpush1.msra.mxu0 %v76
  %170 = vmatprep.subr.mxu0 0.0
  %171 = vmatpush1.msra.mxu0 %v77
  %172 = vmatprep.subr.mxu0 0.0
  %173 = vmatpush1.msra.mxu0 %v78
  %174 = vmatprep.subr.mxu0 0.0
  %175 = vmatpush1.msra.mxu0 %v79
  %176 = vmatprep.mubr.f32.mxu0 %v16
  %177 = vmatmul.mubr.f32.gmra.mrb[0].mxu0 0.0
  %v178 = vpop.f32.mrb[0].mxu0
  %v179 = vadd.f32 0.0, %v178
  %v180 = vpop.f32.mrb[0].mxu0
  %181 = vmatprep.mubr.f32.mxu0 %v18
  %182 = vmatmul.mubr.f32.gmra.mrb[0].mxu0 %v17
  %v183 = vpop.f32.mrb[0].mxu0
  %v184 = vadd.f32 0.0, %v183
  %v185 = vpop.f32.mrb[0].mxu0
  %186 = vmatprep.mubr.f32.mxu0 %v20
  %187 = vmatmul.mubr.f32.gmra.mrb[0].mxu0 %v19
  %v188 = vpop.f32.mrb[0].mxu0
  %v189 = vadd.f32 0.0, %v188
  %v190 = vpop.f32.mrb[0].mxu0
  %191 = vmatprep.mubr.f32.mxu0 %v22
  %192 = vmatmul.mubr.f32.gmra.mrb[0].mxu0 %v21
  %v193 = vpop.f32.mrb[0].mxu0
  %v194 = vadd.f32 0.0, %v193
  %v195 = vpop.f32.mrb[0].mxu0
  %196 = vmatprep.mubr.f32.mxu0 %v24
  %197 = vmatmul.mubr.f32.gmra.mrb[0].mxu0 %v23
  %v198 = vpop.f32.mrb[0].mxu0
  %v199 = vadd.f32 0.0, %v198
  %v200 = vpop.f32.mrb[0].mxu0
  %201 = vmatprep.mubr.f32.mxu0 %v26
  %202 = vmatmul.mubr.f32.gmra.mrb[0].mxu0 %v25
  %v203 = vpop.f32.mrb[0].mxu0
  %v204 = vadd.f32 0.0, %v203
  %v205 = vpop.f32.mrb[0].mxu0
  %206 = vmatprep.mubr.f32.mxu0 %v28
  %207 = vmatmul.mubr.f32.gmra.mrb[0].mxu0 %v27
  %v208 = vpop.f32.mrb[0].mxu0
  %v209 = vadd.f32 0.0, %v208
  %v210 = vpop.f32.mrb[0].mxu0
  %211 = vmatprep.mubr.f32.mxu0 %v30
  %212 = vmatmul.mubr.f32.gmra.mrb[0].mxu0 %v29
  %v213 = vpop.f32.mrb[0].mxu0
  %v214 = vadd.f32 0.0, %v213
  %v215 = vpop.f32.mrb[0].mxu0
  %216 = vmatprep.mubr.f32.mxu0 %v32
  %217 = vmatmul.mubr.f32.gmra.mrb[0].mxu0 %v31
  %v218 = vpop.f32.mrb[0].mxu0
  %v219 = vadd.f32 0.0, %v218
  %v220 = vpop.f32.mrb[0].mxu0
  %221 = vmatprep.mubr.f32.mxu0 %v34
  %222 = vmatmul.mubr.f32.gmra.mrb[0].mxu0 %v33
  %v223 = vpop.f32.mrb[0].mxu0
  %v224 = vadd.f32 0.0, %v223
  %v225 = vpop.f32.mrb[0].mxu0
  %226 = vmatprep.mubr.f32.mxu0 %v36
  %227 = vmatmul.mubr.f32.gmra.mrb[0].mxu0 %v35
  %v228 = vpop.f32.mrb[0].mxu0
  %v229 = vadd.f32 0.0, %v228
  %v230 = vpop.f32.mrb[0].mxu0
  %231 = vmatprep.mubr.f32.mxu0 %v38
  %232 = vmatmul.mubr.f32.gmra.mrb[0].mxu0 %v37
  %v233 = vpop.f32.mrb[0].mxu0
  %v234 = vadd.f32 0.0, %v233
  %v235 = vpop.f32.mrb[0].mxu0
  %236 = vmatprep.mubr.f32.mxu0 %v40
  %237 = vmatmul.mubr.f32.gmra.mrb[0].mxu0 %v39
  %v238 = vpop.f32.mrb[0].mxu0
  %v239 = vadd.f32 0.0, %v238
  %v240 = vpop.f32.mrb[0].mxu0
  %241 = vmatprep.mubr.f32.mxu0 %v42
  %242 = vmatmul.mubr.f32.gmra.mrb[0].mxu0 %v41
  %v243 = vpop.f32.mrb[0].mxu0
  %v244 = vadd.f32 0.0, %v243
  %v245 = vpop.f32.mrb[0].mxu0
  %246 = vmatprep.mubr.f32.mxu0 %v44
  %247 = vmatmul.mubr.f32.gmra.mrb[0].mxu0 %v43
  %v248 = vpop.f32.mrb[0].mxu0
  %v249 = vadd.f32 0.0, %v248
  %v250 = vpop.f32.mrb[0].mxu0
  %251 = vmatprep.mubr.f32.mxu0 %v46
  %252 = vmatmul.mubr.f32.gmra.mrb[0].mxu0 %v45
  %v253 = vpop.f32.mrb[0].mxu0
  %v254 = vadd.f32 0.0, %v253
  %v255 = vpop.f32.mrb[0].mxu0
  %256 = vdwg.mxu0
  %257 = vmatprep.subr.mxu0 0.0
  %258 = vmatpush1.msra.mxu0 %v80
  %259 = vmatprep.subr.mxu0 0.0
  %260 = vmatpush1.msra.mxu0 %v81
  %261 = vmatprep.subr.mxu0 0.0
  %262 = vmatpush1.msra.mxu0 %v82
  %263 = vmatprep.subr.mxu0 0.0
  %264 = vmatpush1.msra.mxu0 %v83
  %265 = vmatprep.subr.mxu0 0.0
  %266 = vmatpush1.msra.mxu0 %v84
  %267 = vmatprep.subr.mxu0 0.0
  %268 = vmatpush1.msra.mxu0 %v85
  %269 = vmatprep.subr.mxu0 0.0
  %270 = vmatpush1.msra.mxu0 %v86
  %271 = vmatprep.subr.mxu0 0.0
  %272 = vmatpush1.msra.mxu0 %v87
  %273 = vmatprep.subr.mxu0 0.0
  %274 = vmatpush1.msra.mxu0 %v88
  %275 = vmatprep.subr.mxu0 0.0
  %276 = vmatpush1.msra.mxu0 %v89
  %277 = vmatprep.subr.mxu0 0.0
  %278 = vmatpush1.msra.mxu0 %v90
  %279 = vmatprep.subr.mxu0 0.0
  %280 = vmatpush1.msra.mxu0 %v91
  %281 = vmatprep.subr.mxu0 0.0
  %282 = vmatpush1.msra.mxu0 %v92
  %283 = vmatprep.subr.mxu0 0.0
  %284 = vmatpush1.msra.mxu0 %v93
  %285 = vmatprep.subr.mxu0 0.0
  %286 = vmatpush1.msra.mxu0 %v94
  %287 = vmatprep.subr.mxu0 0.0
  %288 = vmatpush1.msra.mxu0 %v95
  %289 = vmatprep.subr.mxu0 0.0
  %290 = vmatpush1.msra.mxu0 %v96
  %291 = vmatprep.subr.mxu0 0.0
  %292 = vmatpush1.msra.mxu0 %v97
  %293 = vmatprep.subr.mxu0 0.0
  %294 = vmatpush1.msra.mxu0 %v98
  %295 = vmatprep.subr.mxu0 0.0
  %296 = vmatpush1.msra.mxu0 %v99
  %297 = vmatprep.subr.mxu0 0.0
  %298 = vmatpush1.msra.mxu0 %v100
  %299 = vmatprep.subr.mxu0 0.0
  %300 = vmatpush1.msra.mxu0 %v101
  %301 = vmatprep.subr.mxu0 0.0
  %302 = vmatpush1.msra.mxu0 %v102
  %303 = vmatprep.subr.mxu0 0.0
  %304 = vmatpush1.msra.mxu0 %v103
  %305 = vmatprep.subr.mxu0 0.0
  %306 = vmatpush1.msra.mxu0 %v104
  %307 = vmatprep.subr.mxu0 0.0
  %308 = vmatpush1.msra.mxu0 %v105
  %309 = vmatprep.subr.mxu0 0.0
  %310 = vmatpush1.msra.mxu0 %v106
  %311 = vmatprep.subr.mxu0 0.0
  %312 = vmatpush1.msra.mxu0 %v107
  %313 = vmatprep.subr.mxu0 0.0
  %314 = vmatpush1.msra.mxu0 %v108
  %315 = vmatprep.subr.mxu0 0.0
  %316 = vmatpush1.msra.mxu0 %v109
  %317 = vmatprep.subr.mxu0 0.0
  %318 = vmatpush1.msra.mxu0 %v110
  %319 = vmatprep.subr.mxu0 0.0
  %320 = vmatpush1.msra.mxu0 %v111
  %321 = vmatprep.mubr.f32.mxu0 %v18
  %322 = vmatmul.mubr.f32.gmra.mrb[0].mxu0 %v17
  %v323 = vpop.f32.mrb[0].mxu0
  %v324 = vadd.f32 %v179, %v323
  %v325 = vpop.f32.mrb[0].mxu0
  %326 = vmatprep.mubr.f32.mxu0 %v20
  %327 = vmatmul.mubr.f32.gmra.mrb[0].mxu0 %v19
  %v328 = vpop.f32.mrb[0].mxu0
  %v329 = vadd.f32 %v184, %v328
  %v330 = vpop.f32.mrb[0].mxu0
  %331 = vmatprep.mubr.f32.mxu0 %v22
  %332 = vmatmul.mubr.f32.gmra.mrb[0].mxu0 %v21
  %v333 = vpop.f32.mrb[0].mxu0
  %v334 = vadd.f32 %v189, %v333
  %v335 = vpop.f32.mrb[0].mxu0
  %336 = vmatprep.mubr.f32.mxu0 %v24
  %337 = vmatmul.mubr.f32.gmra.mrb[0].mxu0 %v23
  %v338 = vpop.f32.mrb[0].mxu0
  %v339 = vadd.f32 %v194, %v338
  %v340 = vpop.f32.mrb[0].mxu0
  %341 = vmatprep.mubr.f32.mxu0 %v26
  %342 = vmatmul.mubr.f32.gmra.mrb[0].mxu0 %v25
  %v343 = vpop.f32.mrb[0].mxu0
  %v344 = vadd.f32 %v199, %v343
  %v345 = vpop.f32.mrb[0].mxu0
  %346 = vmatprep.mubr.f32.mxu0 %v28
  %347 = vmatmul.mubr.f32.gmra.mrb[0].mxu0 %v27
  %v348 = vpop.f32.mrb[0].mxu0
  %v349 = vadd.f32 %v204, %v348
  %v350 = vpop.f32.mrb[0].mxu0
  %351 = vmatprep.mubr.f32.mxu0 %v30
  %352 = vmatmul.mubr.f32.gmra.mrb[0].mxu0 %v29
  %v353 = vpop.f32.mrb[0].mxu0
  %v354 = vadd.f32 %v209, %v353
  %v355 = vpop.f32.mrb[0].mxu0
  %356 = vmatprep.mubr.f32.mxu0 %v32
  %357 = vmatmul.mubr.f32.gmra.mrb[0].mxu0 %v31
  %v358 = vpop.f32.mrb[0].mxu0
  %v359 = vadd.f32 %v214, %v358
  %v360 = vpop.f32.mrb[0].mxu0
  %361 = vmatprep.mubr.f32.mxu0 %v34
  %362 = vmatmul.mubr.f32.gmra.mrb[0].mxu0 %v33
  %v363 = vpop.f32.mrb[0].mxu0
  %v364 = vadd.f32 %v219, %v363
  %v365 = vpop.f32.mrb[0].mxu0
  %366 = vmatprep.mubr.f32.mxu0 %v36
  %367 = vmatmul.mubr.f32.gmra.mrb[0].mxu0 %v35
  %v368 = vpop.f32.mrb[0].mxu0
  %v369 = vadd.f32 %v224, %v368
  %v370 = vpop.f32.mrb[0].mxu0
  %371 = vmatprep.mubr.f32.mxu0 %v38
  %372 = vmatmul.mubr.f32.gmra.mrb[0].mxu0 %v37
  %v373 = vpop.f32.mrb[0].mxu0
  %v374 = vadd.f32 %v229, %v373
  %v375 = vpop.f32.mrb[0].mxu0
  %376 = vmatprep.mubr.f32.mxu0 %v40
  %377 = vmatmul.mubr.f32.gmra.mrb[0].mxu0 %v39
  %v378 = vpop.f32.mrb[0].mxu0
  %v379 = vadd.f32 %v234, %v378
  %v380 = vpop.f32.mrb[0].mxu0
  %381 = vmatprep.mubr.f32.mxu0 %v42
  %382 = vmatmul.mubr.f32.gmra.mrb[0].mxu0 %v41
  %v383 = vpop.f32.mrb[0].mxu0
  %v384 = vadd.f32 %v239, %v383
  %v385 = vpop.f32.mrb[0].mxu0
  %386 = vmatprep.mubr.f32.mxu0 %v44
  %387 = vmatmul.mubr.f32.gmra.mrb[0].mxu0 %v43
  %v388 = vpop.f32.mrb[0].mxu0
  %v389 = vadd.f32 %v244, %v388
  %v390 = vpop.f32.mrb[0].mxu0
  %391 = vmatprep.mubr.f32.mxu0 %v46
  %392 = vmatmul.mubr.f32.gmra.mrb[0].mxu0 %v45
  %v393 = vpop.f32.mrb[0].mxu0
  %v394 = vadd.f32 %v249, %v393
  %v395 = vpop.f32.mrb[0].mxu0
  %396 = vmatprep.mubr.f32.mxu0 0.0
  %397 = vmatmul.mubr.f32.gmra.mrb[0].mxu0 %v47
  %v398 = vpop.f32.mrb[0].mxu0
  %v399 = vadd.f32 %v254, %v398
  %v400 = vpop.f32.mrb[0].mxu0
  %401 = vdwg.mxu0
  %vm402 = vcmp.gt.f32.partialorder %v324, 0.0
  %vm403 = vcmp.gt.f32.partialorder %v329, 0.0
  %vm404 = vcmp.gt.f32.partialorder %v334, 0.0
  %vm405 = vcmp.gt.f32.partialorder %v339, 0.0
  %vm406 = vcmp.gt.f32.partialorder %v344, 0.0
  %vm407 = vcmp.gt.f32.partialorder %v349, 0.0
  %vm408 = vcmp.gt.f32.partialorder %v354, 0.0
  %vm409 = vcmp.gt.f32.partialorder %v359, 0.0
  %vm410 = vcmp.gt.f32.partialorder %v364, 0.0
  %vm411 = vcmp.gt.f32.partialorder %v369, 0.0
  %vm412 = vcmp.gt.f32.partialorder %v374, 0.0
  %vm413 = vcmp.gt.f32.partialorder %v379, 0.0
  %vm414 = vcmp.gt.f32.partialorder %v384, 0.0
  %vm415 = vcmp.gt.f32.partialorder %v389, 0.0
  %vm416 = vcmp.gt.f32.partialorder %v394, 0.0
  %vm417 = vcmp.gt.f32.partialorder %v399, 0.0
  %v418 = vmul.f32 %v324, 0.2
  %v419 = vmul.f32 %v329, 0.2
  %v420 = vmul.f32 %v334, 0.2
  %v421 = vmul.f32 %v339, 0.2
  %v422 = vmul.f32 %v344, 0.2
  %v423 = vmul.f32 %v349, 0.2
  %v424 = vmul.f32 %v354, 0.2
  %v425 = vmul.f32 %v359, 0.2
  %v426 = vmul.f32 %v364, 0.2
  %v427 = vmul.f32 %v369, 0.2
  %v428 = vmul.f32 %v374, 0.2
  %v429 = vmul.f32 %v379, 0.2
  %v430 = vmul.f32 %v384, 0.2
  %v431 = vmul.f32 %v389, 0.2
  %v432 = vmul.f32 %v394, 0.2
  %v433 = vmul.f32 %v399, 0.2
  %v434 = vsel %vm402, %v324, %v418
  %v435 = vsel %vm403, %v329, %v419
  %v436 = vsel %vm404, %v334, %v420
  %v437 = vsel %vm405, %v339, %v421
  %v438 = vsel %vm406, %v344, %v422
  %v439 = vsel %vm407, %v349, %v423
  %v440 = vsel %vm408, %v354, %v424
  %v441 = vsel %vm409, %v359, %v425
  %v442 = vsel %vm410, %v364, %v426
  %v443 = vsel %vm411, %v369, %v427
  %v444 = vsel %vm412, %v374, %v428
  %v445 = vsel %vm413, %v379, %v429
  %v446 = vsel %vm414, %v384, %v430
  %v447 = vsel %vm415, %v389, %v431
  %v448 = vsel %vm416, %v394, %v432
  %v449 = vsel %vm417, %v399, %v433
  %v450 = vld [vmem:[%s2] sm:$0xff]
  %v451 = vld [vmem:[%s2 + $0x8] sm:$0xff]
  %v452 = vld [vmem:[%s2 + $0x10] sm:$0xff]
  %v453 = vld [vmem:[%s2 + $0x18] sm:$0xff]
  %v454 = vld [vmem:[%s2 + $0x20] sm:$0xff]
  %v455 = vld [vmem:[%s2 + $0x28] sm:$0xff]
  %v456 = vld [vmem:[%s2 + $0x30] sm:$0xff]
  %v457 = vld [vmem:[%s2 + $0x38] sm:$0xff]
  %v458 = vld [vmem:[%s2 + $0x40] sm:$0xff]
  %v459 = vld [vmem:[%s2 + $0x48] sm:$0xff]
  %v460 = vld [vmem:[%s2 + $0x50] sm:$0xff]
  %v461 = vld [vmem:[%s2 + $0x58] sm:$0xff]
  %v462 = vld [vmem:[%s2 + $0x60] sm:$0xff]
  %v463 = vld [vmem:[%s2 + $0x68] sm:$0xff]
  %v464 = vld [vmem:[%s2 + $0x70] sm:$0xff]
  %v465 = vld [vmem:[%s2 + $0x78] sm:$0xff]
  %v466 = vld [vmem:[%s2 + $0x80] sm:$0xff]
  %v467 = vld [vmem:[%s2 + $0x88] sm:$0xff]
  %v468 = vld [vmem:[%s2 + $0x90] sm:$0xff]
  %v469 = vld [vmem:[%s2 + $0x98] sm:$0xff]
  %v470 = vld [vmem:[%s2 + $0xa0] sm:$0xff]
  %v471 = vld [vmem:[%s2 + $0xa8] sm:$0xff]
  %v472 = vld [vmem:[%s2 + $0xb0] sm:$0xff]
  %v473 = vld [vmem:[%s2 + $0xb8] sm:$0xff]
  %v474 = vld [vmem:[%s2 + $0xc0] sm:$0xff]
  %v475 = vld [vmem:[%s2 + $0xc8] sm:$0xff]
  %v476 = vld [vmem:[%s2 + $0xd0] sm:$0xff]
  %v477 = vld [vmem:[%s2 + $0xd8] sm:$0xff]
  %v478 = vld [vmem:[%s2 + $0xe0] sm:$0xff]
  %v479 = vld [vmem:[%s2 + $0xe8] sm:$0xff]
  %v480 = vld [vmem:[%s2 + $0xf0] sm:$0xff]
  %v481 = vld [vmem:[%s2 + $0xf8] sm:$0xff]
  %v482 = vld [vmem:[%s2 + $0x100] sm:$0xff]
  %v483 = vld [vmem:[%s2 + $0x108] sm:$0xff]
  %v484 = vld [vmem:[%s2 + $0x110] sm:$0xff]
  %v485 = vld [vmem:[%s2 + $0x118] sm:$0xff]
  %v486 = vld [vmem:[%s2 + $0x120] sm:$0xff]
  %v487 = vld [vmem:[%s2 + $0x128] sm:$0xff]
  %v488 = vld [vmem:[%s2 + $0x130] sm:$0xff]
  %v489 = vld [vmem:[%s2 + $0x138] sm:$0xff]
  %v490 = vld [vmem:[%s2 + $0x140] sm:$0xff]
  %v491 = vld [vmem:[%s2 + $0x148] sm:$0xff]
  %v492 = vld [vmem:[%s2 + $0x150] sm:$0xff]
  %v493 = vld [vmem:[%s2 + $0x158] sm:$0xff]
  %v494 = vld [vmem:[%s2 + $0x160] sm:$0xff]
  %v495 = vld [vmem:[%s2 + $0x168] sm:$0xff]
  %v496 = vld [vmem:[%s2 + $0x170] sm:$0xff]
  %v497 = vld [vmem:[%s2 + $0x178] sm:$0xff]
  %v498 = vld [vmem:[%s2 + $0x180] sm:$0xff]
  %v499 = vld [vmem:[%s2 + $0x188] sm:$0xff]
  %v500 = vld [vmem:[%s2 + $0x190] sm:$0xff]
  %v501 = vld [vmem:[%s2 + $0x198] sm:$0xff]
  %v502 = vld [vmem:[%s2 + $0x1a0] sm:$0xff]
  %v503 = vld [vmem:[%s2 + $0x1a8] sm:$0xff]
  %v504 = vld [vmem:[%s2 + $0x1b0] sm:$0xff]
  %v505 = vld [vmem:[%s2 + $0x1b8] sm:$0xff]
  %v506 = vld [vmem:[%s2 + $0x1c0] sm:$0xff]
  %v507 = vld [vmem:[%s2 + $0x1c8] sm:$0xff]
  %v508 = vld [vmem:[%s2 + $0x1d0] sm:$0xff]
  %v509 = vld [vmem:[%s2 + $0x1d8] sm:$0xff]
  %v510 = vld [vmem:[%s2 + $0x1e0] sm:$0xff]
  %v511 = vld [vmem:[%s2 + $0x1e8] sm:$0xff]
  %v512 = vld [vmem:[%s2 + $0x1f0] sm:$0xff]
  %v513 = vld [vmem:[%s2 + $0x1f8] sm:$0xff]
  %514 = vmatprep.subr.mxu0 0.0
  %515 = vmatpush1.msra.mxu0 %v450
  %516 = vmatprep.subr.mxu0 0.0
  %517 = vmatpush1.msra.mxu0 %v451
  %518 = vmatprep.subr.mxu0 0.0
  %519 = vmatpush1.msra.mxu0 %v452
  %520 = vmatprep.subr.mxu0 0.0
  %521 = vmatpush1.msra.mxu0 %v453
  %522 = vmatprep.subr.mxu0 0.0
  %523 = vmatpush1.msra.mxu0 %v454
  %524 = vmatprep.subr.mxu0 0.0
  %525 = vmatpush1.msra.mxu0 %v455
  %526 = vmatprep.subr.mxu0 0.0
  %527 = vmatpush1.msra.mxu0 %v456
  %528 = vmatprep.subr.mxu0 0.0
  %529 = vmatpush1.msra.mxu0 %v457
  %530 = vmatprep.subr.mxu0 0.0
  %531 = vmatpush1.msra.mxu0 %v458
  %532 = vmatprep.subr.mxu0 0.0
  %533 = vmatpush1.msra.mxu0 %v459
  %534 = vmatprep.subr.mxu0 0.0
  %535 = vmatpush1.msra.mxu0 %v460
  %536 = vmatprep.subr.mxu0 0.0
  %537 = vmatpush1.msra.mxu0 %v461
  %538 = vmatprep.subr.mxu0 0.0
  %539 = vmatpush1.msra.mxu0 %v462
  %540 = vmatprep.subr.mxu0 0.0
  %541 = vmatpush1.msra.mxu0 %v463
  %542 = vmatprep.subr.mxu0 0.0
  %543 = vmatpush1.msra.mxu0 %v464
  %544 = vmatprep.subr.mxu0 0.0
  %545 = vmatpush1.msra.mxu0 %v465
  %546 = vmatprep.subr.mxu0 0.0
  %547 = vmatpush1.msra.mxu0 %v466
  %548 = vmatprep.subr.mxu0 0.0
  %549 = vmatpush1.msra.mxu0 %v467
  %550 = vmatprep.subr.mxu0 0.0
  %551 = vmatpush1.msra.mxu0 %v468
  %552 = vmatprep.subr.mxu0 0.0
  %553 = vmatpush1.msra.mxu0 %v469
  %554 = vmatprep.subr.mxu0 0.0
  %555 = vmatpush1.msra.mxu0 %v470
  %556 = vmatprep.subr.mxu0 0.0
  %557 = vmatpush1.msra.mxu0 %v471
  %558 = vmatprep.subr.mxu0 0.0
  %559 = vmatpush1.msra.mxu0 %v472
  %560 = vmatprep.subr.mxu0 0.0
  %561 = vmatpush1.msra.mxu0 %v473
  %562 = vmatprep.subr.mxu0 0.0
  %563 = vmatpush1.msra.mxu0 %v474
  %564 = vmatprep.subr.mxu0 0.0
  %565 = vmatpush1.msra.mxu0 %v475
  %566 = vmatprep.subr.mxu0 0.0
  %567 = vmatpush1.msra.mxu0 %v476
  %568 = vmatprep.subr.mxu0 0.0
  %569 = vmatpush1.msra.mxu0 %v477
  %570 = vmatprep.subr.mxu0 0.0
  %571 = vmatpush1.msra.mxu0 %v478
  %572 = vmatprep.subr.mxu0 0.0
  %573 = vmatpush1.msra.mxu0 %v479
  %574 = vmatprep.subr.mxu0 0.0
  %575 = vmatpush1.msra.mxu0 %v480
  %576 = vmatprep.subr.mxu0 0.0
  %577 = vmatpush1.msra.mxu0 %v481
  %578 = vmatprep.mubr.f32.mxu0 %v434
  %579 = vmatmul.mubr.f32.gmra.mrb[0].mxu0 0.0
  %v580 = vpop.f32.mrb[0].mxu0
  %v581 = vadd.f32 0.0, %v580
  %v582 = vpop.f32.mrb[0].mxu0
  %583 = vmatprep.mubr.f32.mxu0 %v436
  %584 = vmatmul.mubr.f32.gmra.mrb[0].mxu0 %v435
  %v585 = vpop.f32.mrb[0].mxu0
  %v586 = vadd.f32 0.0, %v585
  %v587 = vpop.f32.mrb[0].mxu0
  %588 = vmatprep.mubr.f32.mxu0 %v438
  %589 = vmatmul.mubr.f32.gmra.mrb[0].mxu0 %v437
  %v590 = vpop.f32.mrb[0].mxu0
  %v591 = vadd.f32 0.0, %v590
  %v592 = vpop.f32.mrb[0].mxu0
  %593 = vmatprep.mubr.f32.mxu0 %v440
  %594 = vmatmul.mubr.f32.gmra.mrb[0].mxu0 %v439
  %v595 = vpop.f32.mrb[0].mxu0
  %v596 = vadd.f32 0.0, %v595
  %v597 = vpop.f32.mrb[0].mxu0
  %598 = vmatprep.mubr.f32.mxu0 %v442
  %599 = vmatmul.mubr.f32.gmra.mrb[0].mxu0 %v441
  %v600 = vpop.f32.mrb[0].mxu0
  %v601 = vadd.f32 0.0, %v600
  %v602 = vpop.f32.mrb[0].mxu0
  %603 = vmatprep.mubr.f32.mxu0 %v444
  %604 = vmatmul.mubr.f32.gmra.mrb[0].mxu0 %v443
  %v605 = vpop.f32.mrb[0].mxu0
  %v606 = vadd.f32 0.0, %v605
  %v607 = vpop.f32.mrb[0].mxu0
  %608 = vmatprep.mubr.f32.mxu0 %v446
  %609 = vmatmul.mubr.f32.gmra.mrb[0].mxu0 %v445
  %v610 = vpop.f32.mrb[0].mxu0
  %v611 = vadd.f32 0.0, %v610
  %v612 = vpop.f32.mrb[0].mxu0
  %613 = vmatprep.mubr.f32.mxu0 %v448
  %614 = vmatmul.mubr.f32.gmra.mrb[0].mxu0 %v447
  %v615 = vpop.f32.mrb[0].mxu0
  %v616 = vadd.f32 0.0, %v615
  %v617 = vpop.f32.mrb[0].mxu0
  %618 = vdwg.mxu0
  %619 = vmatprep.subr.mxu0 0.0
  %620 = vmatpush1.msra.mxu0 %v482
  %621 = vmatprep.subr.mxu0 0.0
  %622 = vmatpush1.msra.mxu0 %v483
  %623 = vmatprep.subr.mxu0 0.0
  %624 = vmatpush1.msra.mxu0 %v484
  %625 = vmatprep.subr.mxu0 0.0
  %626 = vmatpush1.msra.mxu0 %v485
  %627 = vmatprep.subr.mxu0 0.0
  %628 = vmatpush1.msra.mxu0 %v486
  %629 = vmatprep.subr.mxu0 0.0
  %630 = vmatpush1.msra.mxu0 %v487
  %631 = vmatprep.subr.mxu0 0.0
  %632 = vmatpush1.msra.mxu0 %v488
  %633 = vmatprep.subr.mxu0 0.0
  %634 = vmatpush1.msra.mxu0 %v489
  %635 = vmatprep.subr.mxu0 0.0
  %636 = vmatpush1.msra.mxu0 %v490
  %637 = vmatprep.subr.mxu0 0.0
  %638 = vmatpush1.msra.mxu0 %v491
  %639 = vmatprep.subr.mxu0 0.0
  %640 = vmatpush1.msra.mxu0 %v492
  %641 = vmatprep.subr.mxu0 0.0
  %642 = vmatpush1.msra.mxu0 %v493
  %643 = vmatprep.subr.mxu0 0.0
  %644 = vmatpush1.msra.mxu0 %v494
  %645 = vmatprep.subr.mxu0 0.0
  %646 = vmatpush1.msra.mxu0 %v495
  %647 = vmatprep.subr.mxu0 0.0
  %648 = vmatpush1.msra.mxu0 %v496
  %649 = vmatprep.subr.mxu0 0.0
  %650 = vmatpush1.msra.mxu0 %v497
  %651 = vmatprep.subr.mxu0 0.0
  %652 = vmatpush1.msra.mxu0 %v498
  %653 = vmatprep.subr.mxu0 0.0
  %654 = vmatpush1.msra.mxu0 %v499
  %655 = vmatprep.subr.mxu0 0.0
  %656 = vmatpush1.msra.mxu0 %v500
  %657 = vmatprep.subr.mxu0 0.0
  %658 = vmatpush1.msra.mxu0 %v501
  %659 = vmatprep.subr.mxu0 0.0
  %660 = vmatpush1.msra.mxu0 %v502
  %661 = vmatprep.subr.mxu0 0.0
  %662 = vmatpush1.msra.mxu0 %v503
  %663 = vmatprep.subr.mxu0 0.0
  %664 = vmatpush1.msra.mxu0 %v504
  %665 = vmatprep.subr.mxu0 0.0
  %666 = vmatpush1.msra.mxu0 %v505
  %667 = vmatprep.subr.mxu0 0.0
  %668 = vmatpush1.msra.mxu0 %v506
  %669 = vmatprep.subr.mxu0 0.0
  %670 = vmatpush1.msra.mxu0 %v507
  %671 = vmatprep.subr.mxu0 0.0
  %672 = vmatpush1.msra.mxu0 %v508
  %673 = vmatprep.subr.mxu0 0.0
  %674 = vmatpush1.msra.mxu0 %v509
  %675 = vmatprep.subr.mxu0 0.0
  %676 = vmatpush1.msra.mxu0 %v510
  %677 = vmatprep.subr.mxu0 0.0
  %678 = vmatpush1.msra.mxu0 %v511
  %679 = vmatprep.subr.mxu0 0.0
  %680 = vmatpush1.msra.mxu0 %v512
  %681 = vmatprep.subr.mxu0 0.0
  %682 = vmatpush1.msra.mxu0 %v513
  %683 = vmatprep.mubr.f32.mxu0 %v436
  %684 = vmatmul.mubr.f32.gmra.mrb[0].mxu0 %v435
  %v685 = vpop.f32.mrb[0].mxu0
  %v686 = vadd.f32 %v581, %v685
  %v687 = vpop.f32.mrb[0].mxu0
  %688 = vmatprep.mubr.f32.mxu0 %v438
  %689 = vmatmul.mubr.f32.gmra.mrb[0].mxu0 %v437
  %v690 = vpop.f32.mrb[0].mxu0
  %v691 = vadd.f32 %v586, %v690
  %v692 = vpop.f32.mrb[0].mxu0
  %693 = vmatprep.mubr.f32.mxu0 %v440
  %694 = vmatmul.mubr.f32.gmra.mrb[0].mxu0 %v439
  %v695 = vpop.f32.mrb[0].mxu0
  %v696 = vadd.f32 %v591, %v695
  %v697 = vpop.f32.mrb[0].mxu0
  %698 = vmatprep.mubr.f32.mxu0 %v442
  %699 = vmatmul.mubr.f32.gmra.mrb[0].mxu0 %v441
  %v700 = vpop.f32.mrb[0].mxu0
  %v701 = vadd.f32 %v596, %v700
  %v702 = vpop.f32.mrb[0].mxu0
  %703 = vmatprep.mubr.f32.mxu0 %v444
  %704 = vmatmul.mubr.f32.gmra.mrb[0].mxu0 %v443
  %v705 = vpop.f32.mrb[0].mxu0
  %v706 = vadd.f32 %v601, %v705
  %v707 = vpop.f32.mrb[0].mxu0
  %708 = vmatprep.mubr.f32.mxu0 %v446
  %709 = vmatmul.mubr.f32.gmra.mrb[0].mxu0 %v445
  %v710 = vpop.f32.mrb[0].mxu0
  %v711 = vadd.f32 %v606, %v710
  %v712 = vpop.f32.mrb[0].mxu0
  %713 = vmatprep.mubr.f32.mxu0 %v448
  %714 = vmatmul.mubr.f32.gmra.mrb[0].mxu0 %v447
  %v715 = vpop.f32.mrb[0].mxu0
  %v716 = vadd.f32 %v611, %v715
  %v717 = vpop.f32.mrb[0].mxu0
  %718 = vmatprep.mubr.f32.mxu0 0.0
  %719 = vmatmul.mubr.f32.gmra.mrb[0].mxu0 %v449
  %v720 = vpop.f32.mrb[0].mxu0
  %v721 = vadd.f32 %v616, %v720
  %v722 = vpop.f32.mrb[0].mxu0
  %723 = vdwg.mxu0
  %724 = vst [vmem:[%s3] sm:$0xff] %v686
  %725 = vst [vmem:[%s3 + $0x8] sm:$0xff] %v691
  %726 = vst [vmem:[%s3 + $0x10] sm:$0xff] %v696
  %727 = vst [vmem:[%s3 + $0x18] sm:$0xff] %v701
  %728 = vst [vmem:[%s3 + $0x20] sm:$0xff] %v706
  %729 = vst [vmem:[%s3 + $0x28] sm:$0xff] %v711
  %730 = vst [vmem:[%s3 + $0x30] sm:$0xff] %v716
  %731 = vst [vmem:[%s3 + $0x38] sm:$0xff] %v721
  %s732 = smul.u32 0, 8
  %s733 = ssub.s32 2, %s732
  %p734 = scmp.gt.s32.totalorder %s733, 0
  %s735 = scalar_select %p734, %s733, 0
  %p736 = scmp.lt.s32.totalorder %s735, 8
  %s737 = scalar_select %p736, %s735, 8
  %v738 = vlaneseq
  %v739 = vshrl.u32 %v738, 7
  %v740 = vstv %s737
  %vm741 = vcmp.lt.s32.totalorder %v739, %v740
  %v742 = vsel %vm741, 1, 0
  %v743 = vcvt.s32.f32 %v742
  %v744 = vmul.f32 %v686, %v743
  %v745 = vmul.f32 %v691, %v743
  %v746 = vmul.f32 %v696, %v743
  %v747 = vmul.f32 %v701, %v743
  %v748 = vmul.f32 %v706, %v743
  %v749 = vmul.f32 %v711, %v743
  %v750 = vmul.f32 %v716, %v743
  %v751 = vmul.f32 %v721, %v743
  %v752 = vadd.f32 %v744, %v745
  %v753 = vadd.f32 %v752, %v746
  %v754 = vadd.f32 %v753, %v747
  %v755 = vadd.f32 %v754, %v748
  %v756 = vadd.f32 %v755, %v749
  %v757 = vadd.f32 %v756, %v750
  %v758 = vadd.f32 %v757, %v751
  %v759 = vrot.slane %v758, 4
  %v760 = vadd.f32 %v758, %v759
  %v761 = vrot.slane %v760, 2
  %v762 = vadd.f32 %v760, %v761
  %v763 = vrot.slane %v762, 1
  %v764 = vadd.f32 %v762, %v763
  %v765 = vmul.f32 %v744, %v744
  %v766 = vmul.f32 %v745, %v745
  %v767 = vmul.f32 %v746, %v746
  %v768 = vmul.f32 %v747, %v747
  %v769 = vmul.f32 %v748, %v748
  %v770 = vmul.f32 %v749, %v749
  %v771 = vmul.f32 %v750, %v750
  %v772 = vmul.f32 %v751, %v751
  %v773 = vadd.f32 %v765, %v766
  %v774 = vadd.f32 %v773, %v767
  %v775 = vadd.f32 %v774, %v768
  %v776 = vadd.f32 %v775, %v769
  %v777 = vadd.f32 %v776, %v770
  %v778 = vadd.f32 %v777, %v771
  %v779 = vadd.f32 %v778, %v772
  %v780 = vrot.slane %v779, 4
  %v781 = vadd.f32 %v779, %v780
  %v782 = vrot.slane %v781, 2
  %v783 = vadd.f32 %v781, %v782
  %v784 = vrot.slane %v783, 1
  %v785 = vadd.f32 %v783, %v784
  %vm786 = vcmask 1040384
  %v787 = vsel %vm786, %v764, %v785
  %788 = vst [vmem:[%s4] sm:$0x3] %v787
  // Predicated region
  $region14: #{disc_forward.3} parent=0 // pred_check
    _
  $region15: #{disc_forward.3} parent=0 // pred_check_branch
    %790 = sbr.rel (0) target = $region17
  $region16: #{disc_forward.3} parent=0 // pred_region
    _
  $region17: #{disc_forward.3} parent=0 // pred_fallthru
    _
  // Predicated region
  $region18: #{disc_forward.3} parent=0 // pred_check
    _
  $region19: #{disc_forward.3} parent=0 // pred_check_branch
    %792 = sbr.rel (0) target = $region21
  $region20: #{disc_forward.3} parent=0 // pred_region
    _
  $region21: #{disc_forward.3} parent=0 // pred_fallthru
    _
  // Predicated region
  $region22: #{disc_forward.3} parent=0 // pred_check
    _
  $region23: #{disc_forward.3} parent=0 // pred_check_branch
    %794 = sbr.rel (0) target = $region25
  $region24: #{disc_forward.3} parent=0 // pred_region
    _
  $region25: #{disc_forward.3} parent=0 // pred_fallthru
    _
  // Predicated region
  $region26: #{disc_forward.3} parent=0 // pred_check
    _
  $region27: #{disc_forward.3} parent=0 // pred_check_branch
    %796 = sbr.rel (0) target = $region29
  $region28: #{disc_forward.3} parent=0 // pred_region
    _
  $region29: #{disc_forward.3} parent=0 // pred_fallthru
    _

// kernel: disc_forward.4
$region0: #{disc_forward.4}
  #allocation0 [shape = 'u32[]', space=smem, size = 0x4, offset = 0x4, fixed_abs, tag = 'smem constant byte address 0x4 - core index']
  #allocation1 [shape = 'u32[144,128]{1,0:T(1,128)}', space=vmem, size = 0x12000, scoped, tag = 'internal scratch']
  %s0 = inlined_call_operand.vmem [shape: f32[8,8,128], index: 0, kind: input, shape index: {}]
  %s1 = inlined_call_operand.vmem [shape: f32[1,2,128], index: 1, kind: input, shape index: {}]
  %s2 = inlined_call_operand.vmem [shape: f32[128,128], index: 2, kind: input, shape index: {}]
  %s3 = inlined_call_operand.vmem [shape: f32[512,128], index: 3, kind: input, shape index: {}]
  %s4 = inlined_call_operand.vmem [shape: f32[4,8,128], index: 4, kind: output, shape index: {0}]
  %s5 = inlined_call_operand.vmem [shape: f32[1,2,128], index: 5, kind: output, shape index: {1}]
  %6 = xla_tuple %s4, %s5
  %s7 = sld [smem:[#allocation0]]
  $region34: #{disc_forward.4} parent=0
    _
  %s9 = ssub.s32 1, %s7
  %s10 = scalar_select 0, %s9, %s7
  // Predicated region
  $region2: #{disc_forward.4} parent=0 // pred_check
    _
  $region3: #{disc_forward.4} parent=0 // pred_check_branch
    %12 = sbr.rel (0) target = $region5
  $region4: #{disc_forward.4} parent=0 // pred_region
    _
  $region5: #{disc_forward.4} parent=0 // pred_fallthru
    _
  // Predicated region
  $region6: #{disc_forward.4} parent=0 // pred_check
    _
  $region7: #{disc_forward.4} parent=0 // pred_check_branch
    %14 = sbr.rel (0) target = $region9
  $region8: #{disc_forward.4} parent=0 // pred_region
    _
  $region9: #{disc_forward.4} parent=0 // pred_fallthru
    _
  // Predicated region
  $region10: #{disc_forward.4} parent=0 // pred_check
    _
  $region11: #{disc_forward.4} parent=0 // pred_check_branch
    %16 = sbr.rel (0) target = $region13
  $region12: #{disc_forward.4} parent=0 // pred_region
    _
  $region13: #{disc_forward.4} parent=0 // pred_fallthru
    _
  // Predicated region
  $region14: #{disc_forward.4} parent=0 // pred_check
    _
  $region15: #{disc_forward.4} parent=0 // pred_check_branch
    %18 = sbr.rel (0) target = $region17
  $region16: #{disc_forward.4} parent=0 // pred_region
    _
  $region17: #{disc_forward.4} parent=0 // pred_fallthru
    _
  %v19 = vld [vmem:[%s1] sm:$0x3]
  %v20 = vld [vmem:[%s2] sm:$0xff]
  %v21 = vld [vmem:[%s2 + $0x8] sm:$0xff]
  %v22 = vld [vmem:[%s2 + $0x10] sm:$0xff]
  %v23 = vld [vmem:[%s2 + $0x18] sm:$0xff]
  %v24 = vld [vmem:[%s2 + $0x20] sm:$0xff]
  %v25 = vld [vmem:[%s2 + $0x28] sm:$0xff]
  %v26 = vld [vmem:[%s2 + $0x30] sm:$0xff]
  %v27 = vld [vmem:[%s2 + $0x38] sm:$0xff]
  %v28 = vld [vmem:[%s2 + $0x40] sm:$0xff]
  %v29 = vld [vmem:[%s2 + $0x48] sm:$0xff]
  %v30 = vld [vmem:[%s2 + $0x50] sm:$0xff]
  %v31 = vld [vmem:[%s2 + $0x58] sm:$0xff]
  %v32 = vld [vmem:[%s2 + $0x60] sm:$0xff]
  %v33 = vld [vmem:[%s2 + $0x68] sm:$0xff]
  %v34 = vld [vmem:[%s2 + $0x70] sm:$0xff]
  %v35 = vld [vmem:[%s2 + $0x78] sm:$0xff]
  %v36 = vadd.f32 %v19, 0.0
  %vm37 = vcmask 1041408
  %v38 = vsel %vm37, %v36, 0.0
  %39 = vmatprep.subr.mxu0 0.0
  %40 = vmatpush1.msra.mxu0 %v20
  %41 = vmatprep.subr.mxu0 0.0
  %42 = vmatpush1.msra.mxu0 %v21
  %43 = vmatprep.subr.mxu0 0.0
  %44 = vmatpush1.msra.mxu0 %v22
  %45 = vmatprep.subr.mxu0 0.0
  %46 = vmatpush1.msra.mxu0 %v23
  %47 = vmatprep.subr.mxu0 0.0
  %48 = vmatpush1.msra.mxu0 %v24
  %49 = vmatprep.subr.mxu0 0.0
  %50 = vmatpush1.msra.mxu0 %v25
  %51 = vmatprep.subr.mxu0 0.0
  %52 = vmatpush1.msra.mxu0 %v26
  %53 = vmatprep.subr.mxu0 0.0
  %54 = vmatpush1.msra.mxu0 %v27
  %55 = vmatprep.subr.mxu0 0.0
  %56 = vmatpush1.msra.mxu0 %v28
  %57 = vmatprep.subr.mxu0 0.0
  %58 = vmatpush1.msra.mxu0 %v29
  %59 = vmatprep.subr.mxu0 0.0
  %60 = vmatpush1.msra.mxu0 %v30
  %61 = vmatprep.subr.mxu0 0.0
  %62 = vmatpush1.msra.mxu0 %v31
  %63 = vmatprep.subr.mxu0 0.0
  %64 = vmatpush1.msra.mxu0 %v32
  %65 = vmatprep.subr.mxu0 0.0
  %66 = vmatpush1.msra.mxu0 %v33
  %67 = vmatprep.subr.mxu0 0.0
  %68 = vmatpush1.msra.mxu0 %v34
  %69 = vmatprep.subr.mxu0 0.0
  %70 = vmatpush1.msra.mxu0 %v35
  %71 = vmatprep.subr.mxu0 0.0
  %72 = vmatpush1.msra.mxu0 0.0
  %73 = vmatprep.subr.mxu0 0.0
  %74 = vmatpush1.msra.mxu0 0.0
  %75 = vmatprep.subr.mxu0 0.0
  %76 = vmatpush1.msra.mxu0 0.0
  %77 = vmatprep.subr.mxu0 0.0
  %78 = vmatpush1.msra.mxu0 0.0
  %79 = vmatprep.subr.mxu0 0.0
  %80 = vmatpush1.msra.mxu0 0.0
  %81 = vmatprep.subr.mxu0 0.0
  %82 = vmatpush1.msra.mxu0 0.0
  %83 = vmatprep.subr.mxu0 0.0
  %84 = vmatpush1.msra.mxu0 0.0
  %85 = vmatprep.subr.mxu0 0.0
  %86 = vmatpush1.msra.mxu0 0.0
  %87 = vmatprep.subr.mxu0 0.0
  %88 = vmatpush1.msra.mxu0 0.0
  %89 = vmatprep.subr.mxu0 0.0
  %90 = vmatpush1.msra.mxu0 0.0
  %91 = vmatprep.subr.mxu0 0.0
  %92 = vmatpush1.msra.mxu0 0.0
  %93 = vmatprep.subr.mxu0 0.0
  %94 = vmatpush1.msra.mxu0 0.0
  %95 = vmatprep.subr.mxu0 0.0
  %96 = vmatpush1.msra.mxu0 0.0
  %97 = vmatprep.subr.mxu0 0.0
  %98 = vmatpush1.msra.mxu0 0.0
  %99 = vmatprep.subr.mxu0 0.0
  %100 = vmatpush1.msra.mxu0 0.0
  %101 = vmatprep.subr.mxu0 0.0
  %102 = vmatpush1.msra.mxu0 0.0
  %103 = vmatprep.mubr.f32.mxu0 0.0
  %104 = vmatmul.mubr.f32.gmra.mrb[0].mxu0 %v38
  %v105 = vpop.f32.mrb[0].mxu0
  %v106 = vadd.f32 0.0, %v105
  %v107 = vpop.f32.mrb[0].mxu0
  %108 = vdwg.mxu0
  %v109 = vrcp.pop 128.0
  %v110 = vmul.f32 %v106, %v109
  %v111 = vmul.f32 %v110, %v110
  %v113 = vrot.slane %v111, 7
  %v115 = vsub.f32 %v110, %v113
  %v116 = vmax.f32 %v115, 0.0
  %v117 = vadd.f32 %v116, 1e-05
  %v118 = vrsqrt.pop %v117
  %v119 = vmul.f32 %v117, %v118
  %vm120 = vcmp.eq.f32.partialorder %v117, inf
  %v121 = vsel %vm120, %v117, %v119
  %vm122 = vcmp.eq.f32.partialorder %v117, 0.0
  %v123 = vand.u32 %v117, 2147483648
  %v124 = vsel %vm122, %v123, %v121
  %v125 = vrcp.pop %v124
  %v126 = vmul.f32 1.0, %v125
  %v127 = vsub.f32 0.0, %v110
  %v129 = vrot.slane %v126, 1
  %v131 = vmul.f32 %v127, %v129
  %v132 = vld [vmem:[%s0] sm:$0xff]
  %v133 = vld [vmem:[%s0 + $0x8] sm:$0xff]
  %v134 = vld [vmem:[%s0 + $0x10] sm:$0xff]
  %v135 = vld [vmem:[%s0 + $0x18] sm:$0xff]
  %v136 = vld [vmem:[%s0 + $0x20] sm:$0xff]
  %v137 = vld [vmem:[%s0 + $0x28] sm:$0xff]
  %v138 = vld [vmem:[%s0 + $0x30] sm:$0xff]
  %v139 = vld [vmem:[%s0 + $0x38] sm:$0xff]
  %v140 = vlaneseq
  %v141 = vshrl.u32 %v140, 7
  %v142 = vsub.s32 1, %v141
  %v143 = vrot.slane %v126, %v142
  %v144 = vmul.f32 %v132, %v143
  %v145 = vmul.f32 %v133, %v143
  %v146 = vmul.f32 %v134, %v143
  %v147 = vmul.f32 %v135, %v143
  %v148 = vmul.f32 %v136, %v143
  %v149 = vmul.f32 %v137, %v143
  %v150 = vmul.f32 %v138, %v143
  %v151 = vmul.f32 %v139, %v143
  %v152 = vlaneseq
  %v153 = vshrl.u32 %v152, 7
  %v154 = vsub.s32 0, %v153
  %v155 = vrot.slane %v131, %v154
  %v156 = vadd.f32 %v144, %v155
  %v157 = vadd.f32 %v145, %v155
  %v158 = vadd.f32 %v146, %v155
  %v159 = vadd.f32 %v147, %v155
  %v160 = vadd.f32 %v148, %v155
  %v161 = vadd.f32 %v149, %v155
  %v162 = vadd.f32 %v150, %v155
  %v163 = vadd.f32 %v151, %v155
  %vm164 = vcmp.gt.f32.partialorder %v156, 0.0
  %vm165 = vcmp.gt.f32.partialorder %v157, 0.0
  %vm166 = vcmp.gt.f32.partialorder %v158, 0.0
  %vm167 = vcmp.gt.f32.partialorder %v159, 0.0
  %vm168 = vcmp.gt.f32.partialorder %v160, 0.0
  %vm169 = vcmp.gt.f32.partialorder %v161, 0.0
  %vm170 = vcmp.gt.f32.partialorder %v162, 0.0
  %vm171 = vcmp.gt.f32.partialorder %v163, 0.0
  %v172 = vmul.f32 %v156, 0.2
  %v173 = vmul.f32 %v157, 0.2
  %v174 = vmul.f32 %v158, 0.2
  %v175 = vmul.f32 %v159, 0.2
  %v176 = vmul.f32 %v160, 0.2
  %v177 = vmul.f32 %v161, 0.2
  %v178 = vmul.f32 %v162, 0.2
  %v179 = vmul.f32 %v163, 0.2
  %v180 = vsel %vm164, %v156, %v172
  %v181 = vsel %vm165, %v157, %v173
  %v182 = vsel %vm166, %v158, %v174
  %v183 = vsel %vm167, %v159, %v175
  %v184 = vsel %vm168, %v160, %v176
  %v185 = vsel %vm169, %v161, %v177
  %v186 = vsel %vm170, %v162, %v178
  %v187 = vsel %vm171, %v163, %v179
  %v188 = vld [vmem:[%s3] sm:$0xff]
  %v189 = vld [vmem:[%s3 + $0x8] sm:$0xff]
  %v190 = vld [vmem:[%s3 + $0x10] sm:$0xff]
  %v191 = vld [vmem:[%s3 + $0x18] sm:$0xff]
  %v192 = vld [vmem:[%s3 + $0x20] sm:$0xff]
  %v193 = vld [vmem:[%s3 + $0x28] sm:$0xff]
  %v194 = vld [vmem:[%s3 + $0x30] sm:$0xff]
  %v195 = vld [vmem:[%s3 + $0x38] sm:$0xff]
  %v196 = vld [vmem:[%s3 + $0x40] sm:$0xff]
  %v197 = vld [vmem:[%s3 + $0x48] sm:$0xff]
  %v198 = vld [vmem:[%s3 + $0x50] sm:$0xff]
  %v199 = vld [vmem:[%s3 + $0x58] sm:$0xff]
  %v200 = vld [vmem:[%s3 + $0x60] sm:$0xff]
  %v201 = vld [vmem:[%s3 + $0x68] sm:$0xff]
  %v202 = vld [vmem:[%s3 + $0x70] sm:$0xff]
  %v203 = vld [vmem:[%s3 + $0x78] sm:$0xff]
  %v204 = vld [vmem:[%s3 + $0x80] sm:$0xff]
  %v205 = vld [vmem:[%s3 + $0x88] sm:$0xff]
  %v206 = vld [vmem:[%s3 + $0x90] sm:$0xff]
  %v207 = vld [vmem:[%s3 + $0x98] sm:$0xff]
  %v208 = vld [vmem:[%s3 + $0xa0] sm:$0xff]
  %v209 = vld [vmem:[%s3 + $0xa8] sm:$0xff]
  %v210 = vld [vmem:[%s3 + $0xb0] sm:$0xff]
  %v211 = vld [vmem:[%s3 + $0xb8] sm:$0xff]
  %v212 = vld [vmem:[%s3 + $0xc0] sm:$0xff]
  %v213 = vld [vmem:[%s3 + $0xc8] sm:$0xff]
  %v214 = vld [vmem:[%s3 + $0xd0] sm:$0xff]
  %v215 = vld [vmem:[%s3 + $0xd8] sm:$0xff]
  %v216 = vld [vmem:[%s3 + $0xe0] sm:$0xff]
  %v217 = vld [vmem:[%s3 + $0xe8] sm:$0xff]
  %v218 = vld [vmem:[%s3 + $0xf0] sm:$0xff]
  %v219 = vld [vmem:[%s3 + $0xf8] sm:$0xff]
  %v220 = vld [vmem:[%s3 + $0x100] sm:$0xff]
  %v221 = vld [vmem:[%s3 + $0x108] sm:$0xff]
  %v222 = vld [vmem:[%s3 + $0x110] sm:$0xff]
  %v223 = vld [vmem:[%s3 + $0x118] sm:$0xff]
  %v224 = vld [vmem:[%s3 + $0x120] sm:$0xff]
  %v225 = vld [vmem:[%s3 + $0x128] sm:$0xff]
  %v226 = vld [vmem:[%s3 + $0x130] sm:$0xff]
  %v227 = vld [vmem:[%s3 + $0x138] sm:$0xff]
  %v228 = vld [vmem:[%s3 + $0x140] sm:$0xff]
  %v229 = vld [vmem:[%s3 + $0x148] sm:$0xff]
  %v230 = vld [vmem:[%s3 + $0x150] sm:$0xff]
  %v231 = vld [vmem:[%s3 + $0x158] sm:$0xff]
  %v232 = vld [vmem:[%s3 + $0x160] sm:$0xff]
  %v233 = vld [vmem:[%s3 + $0x168] sm:$0xff]
  %v234 = vld [vmem:[%s3 + $0x170] sm:$0xff]
  %v235 = vld [vmem:[%s3 + $0x178] sm:$0xff]
  %v236 = vld [vmem:[%s3 + $0x180] sm:$0xff]
  %v237 = vld [vmem:[%s3 + $0x188] sm:$0xff]
  %v238 = vld [vmem:[%s3 + $0x190] sm:$0xff]
  %v239 = vld [vmem:[%s3 + $0x198] sm:$0xff]
  %v240 = vld [vmem:[%s3 + $0x1a0] sm:$0xff]
  %v241 = vld [vmem:[%s3 + $0x1a8] sm:$0xff]
  %v242 = vld [vmem:[%s3 + $0x1b0] sm:$0xff]
  %v243 = vld [vmem:[%s3 + $0x1b8] sm:$0xff]
  %v244 = vld [vmem:[%s3 + $0x1c0] sm:$0xff]
  %v245 = vld [vmem:[%s3 + $0x1c8] sm:$0xff]
  %v246 = vld [vmem:[%s3 + $0x1d0] sm:$0xff]
  %v247 = vld [vmem:[%s3 + $0x1d8] sm:$0xff]
  %v248 = vld [vmem:[%s3 + $0x1e0] sm:$0xff]
  %v249 = vld [vmem:[%s3 + $0x1e8] sm:$0xff]
  %v250 = vld [vmem:[%s3 + $0x1f0] sm:$0xff]
  %v251 = vld [vmem:[%s3 + $0x1f8] sm:$0xff]
  %252 = vmatprep.subr.mxu0 0.0
  %253 = vmatpush1.msra.mxu0 %v188
  %254 = vmatprep.subr.mxu0 0.0
  %255 = vmatpush1.msra.mxu0 %v189
  %256 = vmatprep.subr.mxu0 0.0
  %257 = vmatpush1.msra.mxu0 %v190
  %258 = vmatprep.subr.mxu0 0.0
  %259 = vmatpush1.msra.mxu0 %v191
  %260 = vmatprep.subr.mxu0 0.0
  %261 = vmatpush1.msra.mxu0 %v192
  %262 = vmatprep.subr.mxu0 0.0
  %263 = vmatpush1.msra.mxu0 %v193
  %264 = vmatprep.subr.mxu0 0.0
  %265 = vmatpush1.msra.mxu0 %v194
  %266 = vmatprep.subr.mxu0 0.0
  %267 = vmatpush1.msra.mxu0 %v195
  %268 = vmatprep.subr.mxu0 0.0
  %269 = vmatpush1.msra.mxu0 %v196
  %270 = vmatprep.subr.mxu0 0.0
  %271 = vmatpush1.msra.mxu0 %v197
  %272 = vmatprep.subr.mxu0 0.0
  %273 = vmatpush1.msra.mxu0 %v198
  %274 = vmatprep.subr.mxu0 0.0
  %275 = vmatpush1.msra.mxu0 %v199
  %276 = vmatprep.subr.mxu0 0.0
  %277 = vmatpush1.msra.mxu0 %v200
  %278 = vmatprep.subr.mxu0 0.0
  %279 = vmatpush1.msra.mxu0 %v201
  %280 = vmatprep.subr.mxu0 0.0
  %281 = vmatpush1.msra.mxu0 %v202
  %282 = vmatprep.subr.mxu0 0.0
  %283 = vmatpush1.msra.mxu0 %v203
  %284 = vmatprep.subr.mxu0 0.0
  %285 = vmatpush1.msra.mxu0 %v204
  %286 = vmatprep.subr.mxu0 0.0
  %287 = vmatpush1.msra.mxu0 %v205
  %288 = vmatprep.subr.mxu0 0.0
  %289 = vmatpush1.msra.mxu0 %v206
  %290 = vmatprep.subr.mxu0 0.0
  %291 = vmatpush1.msra.mxu0 %v207
  %292 = vmatprep.subr.mxu0 0.0
  %293 = vmatpush1.msra.mxu0 %v208
  %294 = vmatprep.subr.mxu0 0.0
  %295 = vmatpush1.msra.mxu0 %v209
  %296 = vmatprep.subr.mxu0 0.0
  %297 = vmatpush1.msra.mxu0 %v210
  %298 = vmatprep.subr.mxu0 0.0
  %299 = vmatpush1.msra.mxu0 %v211
  %300 = vmatprep.subr.mxu0 0.0
  %301 = vmatpush1.msra.mxu0 %v212
  %302 = vmatprep.subr.mxu0 0.0
  %303 = vmatpush1.msra.mxu0 %v213
  %304 = vmatprep.subr.mxu0 0.0
  %305 = vmatpush1.msra.mxu0 %v214
  %306 = vmatprep.subr.mxu0 0.0
  %307 = vmatpush1.msra.mxu0 %v215
  %308 = vmatprep.subr.mxu0 0.0
  %309 = vmatpush1.msra.mxu0 %v216
  %310 = vmatprep.subr.mxu0 0.0
  %311 = vmatpush1.msra.mxu0 %v217
  %312 = vmatprep.subr.mxu0 0.0
  %313 = vmatpush1.msra.mxu0 %v218
  %314 = vmatprep.subr.mxu0 0.0
  %315 = vmatpush1.msra.mxu0 %v219
  %316 = vmatprep.mubr.f32.mxu0 %v180
  %317 = vmatmul.mubr.f32.gmra.mrb[0].mxu0 0.0
  %v318 = vpop.f32.mrb[0].mxu0
  %v319 = vadd.f32 0.0, %v318
  %v320 = vpop.f32.mrb[0].mxu0
  %321 = vmatprep.mubr.f32.mxu0 %v182
  %322 = vmatmul.mubr.f32.gmra.mrb[0].mxu0 %v181
  %v323 = vpop.f32.mrb[0].mxu0
  %v324 = vadd.f32 0.0, %v323
  %v325 = vpop.f32.mrb[0].mxu0
  %326 = vmatprep.mubr.f32.mxu0 %v184
  %327 = vmatmul.mubr.f32.gmra.mrb[0].mxu0 %v183
  %v328 = vpop.f32.mrb[0].mxu0
  %v329 = vadd.f32 0.0, %v328
  %v330 = vpop.f32.mrb[0].mxu0
  %331 = vmatprep.mubr.f32.mxu0 %v186
  %332 = vmatmul.mubr.f32.gmra.mrb[0].mxu0 %v185
  %v333 = vpop.f32.mrb[0].mxu0
  %v334 = vadd.f32 0.0, %v333
  %v335 = vpop.f32.mrb[0].mxu0
  %336 = vdwg.mxu0
  %337 = vmatprep.subr.mxu0 0.0
  %338 = vmatpush1.msra.mxu0 %v220
  %339 = vmatprep.subr.mxu0 0.0
  %340 = vmatpush1.msra.mxu0 %v221
  %341 = vmatprep.subr.mxu0 0.0
  %342 = vmatpush1.msra.mxu0 %v222
  %343 = vmatprep.subr.mxu0 0.0
  %344 = vmatpush1.msra.mxu0 %v223
  %345 = vmatprep.subr.mxu0 0.0
  %346 = vmatpush1.msra.mxu0 %v224
  %347 = vmatprep.subr.mxu0 0.0
  %348 = vmatpush1.msra.mxu0 %v225
  %349 = vmatprep.subr.mxu0 0.0
  %350 = vmatpush1.msra.mxu0 %v226
  %351 = vmatprep.subr.mxu0 0.0
  %352 = vmatpush1.msra.mxu0 %v227
  %353 = vmatprep.subr.mxu0 0.0
  %354 = vmatpush1.msra.mxu0 %v228
  %355 = vmatprep.subr.mxu0 0.0
  %356 = vmatpush1.msra.mxu0 %v229
  %357 = vmatprep.subr.mxu0 0.0
  %358 = vmatpush1.msra.mxu0 %v230
  %359 = vmatprep.subr.mxu0 0.0
  %360 = vmatpush1.msra.mxu0 %v231
  %361 = vmatprep.subr.mxu0 0.0
  %362 = vmatpush1.msra.mxu0 %v232
  %363 = vmatprep.subr.mxu0 0.0
  %364 = vmatpush1.msra.mxu0 %v233
  %365 = vmatprep.subr.mxu0 0.0
  %366 = vmatpush1.msra.mxu0 %v234
  %367 = vmatprep.subr.mxu0 0.0
  %368 = vmatpush1.msra.mxu0 %v235
  %369 = vmatprep.subr.mxu0 0.0
  %370 = vmatpush1.msra.mxu0 %v236
  %371 = vmatprep.subr.mxu0 0.0
  %372 = vmatpush1.msra.mxu0 %v237
  %373 = vmatprep.subr.mxu0 0.0
  %374 = vmatpush1.msra.mxu0 %v238
  %375 = vmatprep.subr.mxu0 0.0
  %376 = vmatpush1.msra.mxu0 %v239
  %377 = vmatprep.subr.mxu0 0.0
  %378 = vmatpush1.msra.mxu0 %v240
  %379 = vmatprep.subr.mxu0 0.0
  %380 = vmatpush1.msra.mxu0 %v241
  %381 = vmatprep.subr.mxu0 0.0
  %382 = vmatpush1.msra.mxu0 %v242
  %383 = vmatprep.subr.mxu0 0.0
  %384 = vmatpush1.msra.mxu0 %v243
  %385 = vmatprep.subr.mxu0 0.0
  %386 = vmatpush1.msra.mxu0 %v244
  %387 = vmatprep.subr.mxu0 0.0
  %388 = vmatpush1.msra.mxu0 %v245
  %389 = vmatprep.subr.mxu0 0.0
  %390 = vmatpush1.msra.mxu0 %v246
  %391 = vmatprep.subr.mxu0 0.0
  %392 = vmatpush1.msra.mxu0 %v247
  %393 = vmatprep.subr.mxu0 0.0
  %394 = vmatpush1.msra.mxu0 %v248
  %395 = vmatprep.subr.mxu0 0.0
  %396 = vmatpush1.msra.mxu0 %v249
  %397 = vmatprep.subr.mxu0 0.0
  %398 = vmatpush1.msra.mxu0 %v250
  %399 = vmatprep.subr.mxu0 0.0
  %400 = vmatpush1.msra.mxu0 %v251
  %401 = vmatprep.mubr.f32.mxu0 %v182
  %402 = vmatmul.mubr.f32.gmra.mrb[0].mxu0 %v181
  %v403 = vpop.f32.mrb[0].mxu0
  %v404 = vadd.f32 %v319, %v403
  %v405 = vpop.f32.mrb[0].mxu0
  %406 = vmatprep.mubr.f32.mxu0 %v184
  %407 = vmatmul.mubr.f32.gmra.mrb[0].mxu0 %v183
  %v408 = vpop.f32.mrb[0].mxu0
  %v409 = vadd.f32 %v324, %v408
  %v410 = vpop.f32.mrb[0].mxu0
  %411 = vmatprep.mubr.f32.mxu0 %v186
  %412 = vmatmul.mubr.f32.gmra.mrb[0].mxu0 %v185
  %v413 = vpop.f32.mrb[0].mxu0
  %v414 = vadd.f32 %v329, %v413
  %v415 = vpop.f32.mrb[0].mxu0
  %416 = vmatprep.mubr.f32.mxu0 0.0
  %417 = vmatmul.mubr.f32.gmra.mrb[0].mxu0 %v187
  %v418 = vpop.f32.mrb[0].mxu0
  %v419 = vadd.f32 %v334, %v418
  %v420 = vpop.f32.mrb[0].mxu0
  %421 = vdwg.mxu0
  %422 = vst [vmem:[%s4] sm:$0xff] %v404
  %423 = vst [vmem:[%s4 + $0x8] sm:$0xff] %v409
  %424 = vst [vmem:[%s4 + $0x10] sm:$0xff] %v414
  %425 = vst [vmem:[%s4 + $0x18] sm:$0xff] %v419
  %s426 = smul.u32 0, 8
  %s427 = ssub.s32 2, %s426
  %p428 = scmp.gt.s32.totalorder %s427, 0
  %s429 = scalar_select %p428, %s427, 0
  %p430 = scmp.lt.s32.totalorder %s429, 8
  %s431 = scalar_select %p430, %s429, 8
  %v432 = vlaneseq
  %v433 = vshrl.u32 %v432, 7
  %v434 = vstv %s431
  %vm435 = vcmp.lt.s32.totalorder %v433, %v434
  %v436 = vsel %vm435, 1, 0
  %v437 = vcvt.s32.f32 %v436
  %v438 = vmul.f32 %v404, %v437
  %v439 = vmul.f32 %v409, %v437
  %v440 = vmul.f32 %v414, %v437
  %v441 = vmul.f32 %v419, %v437
  %v442 = vadd.f32 %v438, %v439
  %v443 = vadd.f32 %v442, %v440
  %v444 = vadd.f32 %v443, %v441
  %v445 = vrot.slane %v444, 4
  %v446 = vadd.f32 %v444, %v445
  %v447 = vrot.slane %v446, 2
  %v448 = vadd.f32 %v446, %v447
  %v449 = vrot.slane %v448, 1
  %v450 = vadd.f32 %v448, %v449
  %v451 = vmul.f32 %v438, %v438
  %v452 = vmul.f32 %v439, %v439
  %v453 = vmul.f32 %v440, %v440
  %v454 = vmul.f32 %v441, %v441
  %v455 = vadd.f32 %v451, %v452
  %v456 = vadd.f32 %v455, %v453
  %v457 = vadd.f32 %v456, %v454
  %v458 = vrot.slane %v457, 4
  %v459 = vadd.f32 %v457, %v458
  %v460 = vrot.slane %v459, 2
  %v461 = vadd.f32 %v459, %v460
  %v462 = vrot.slane %v461, 1
  %v463 = vadd.f32 %v461, %v462
  %vm464 = vcmask 1040384
  %v465 = vsel %vm464, %v450, %v463
  %466 = vst [vmem:[%s5] sm:$0x3] %v465
  // Predicated region
  $region18: #{disc_forward.4} parent=0 // pred_check
    _
  $region19: #{disc_forward.4} parent=0 // pred_check_branch
    %468 = sbr.rel (0) target = $region21
  $region20: #{disc_forward.4} parent=0 // pred_region
    _
  $region21: #{disc_forward.4} parent=0 // pred_fallthru
    _
  // Predicated region
  $region22: #{disc_forward.4} parent=0 // pred_check
    _
  $region23: #{disc_forward.4} parent=0 // pred_check_branch
    %470 = sbr.rel (0) target = $region25
  $region24: #{disc_forward.4} parent=0 // pred_region
    _
  $region25: #{disc_forward.4} parent=0 // pred_fallthru
    _
  // Predicated region
  $region26: #{disc_forward.4} parent=0 // pred_check
    _
  $region27: #{disc_forward.4} parent=0 // pred_check_branch
    %472 = sbr.rel (0) target = $region29
  $region28: #{disc_forward.4} parent=0 // pred_region
    _
  $region29: #{disc_forward.4} parent=0 // pred_fallthru
    _
  // Predicated region
  $region30: #{disc_forward.4} parent=0 // pred_check
    _
  $region31: #{disc_forward.4} parent=0 // pred_check_branch
    %474 = sbr.rel (0) target = $region33
  $region32: #{disc_forward.4} parent=0 // pred_region
    _
  $region33: #{disc_forward.4} parent=0 // pred_fallthru
    _

// kernel: disc_forward.5
$region0: #{disc_forward.5}
  #allocation0 [shape = 'u32[]', space=smem, size = 0x4, offset = 0x4, fixed_abs, tag = 'smem constant byte address 0x4 - core index']
  #allocation1 [shape = 'u32[144,128]{1,0:T(1,128)}', space=vmem, size = 0x12000, scoped, tag = 'internal scratch']
  %s0 = inlined_call_operand.vmem [shape: f32[4,8,128], index: 0, kind: input, shape index: {}]
  %s1 = inlined_call_operand.vmem [shape: f32[1,2,128], index: 1, kind: input, shape index: {}]
  %s2 = inlined_call_operand.vmem [shape: f32[128,128], index: 2, kind: input, shape index: {}]
  %s3 = inlined_call_operand.vmem [shape: f32[4,1,128], index: 3, kind: input, shape index: {}]
  %s4 = inlined_call_operand.vmem [shape: f32[8,1], index: 4, kind: output, shape index: {}]
  %s5 = sld [smem:[#allocation0]]
  $region26: #{disc_forward.5} parent=0
    _
  %s7 = ssub.s32 1, %s5
  %s8 = scalar_select 0, %s7, %s5
  // Predicated region
  $region2: #{disc_forward.5} parent=0 // pred_check
    _
  $region3: #{disc_forward.5} parent=0 // pred_check_branch
    %10 = sbr.rel (0) target = $region5
  $region4: #{disc_forward.5} parent=0 // pred_region
    _
  $region5: #{disc_forward.5} parent=0 // pred_fallthru
    _
  // Predicated region
  $region6: #{disc_forward.5} parent=0 // pred_check
    _
  $region7: #{disc_forward.5} parent=0 // pred_check_branch
    %12 = sbr.rel (0) target = $region9
  $region8: #{disc_forward.5} parent=0 // pred_region
    _
  $region9: #{disc_forward.5} parent=0 // pred_fallthru
    _
  // Predicated region
  $region10: #{disc_forward.5} parent=0 // pred_check
    _
  $region11: #{disc_forward.5} parent=0 // pred_check_branch
    %14 = sbr.rel (0) target = $region13
  $region12: #{disc_forward.5} parent=0 // pred_region
    _
  $region13: #{disc_forward.5} parent=0 // pred_fallthru
    _
  // Predicated region
  $region14: #{disc_forward.5} parent=0 // pred_check
    _
  $region15: #{disc_forward.5} parent=0 // pred_check_branch
    %16 = sbr.rel (0) target = $region17
  $region16: #{disc_forward.5} parent=0 // pred_region
    _
  $region17: #{disc_forward.5} parent=0 // pred_fallthru
    _
  %v17 = vld [vmem:[%s1] sm:$0x3]
  %v18 = vld [vmem:[%s2] sm:$0xff]
  %v19 = vld [vmem:[%s2 + $0x8] sm:$0xff]
  %v20 = vld [vmem:[%s2 + $0x10] sm:$0xff]
  %v21 = vld [vmem:[%s2 + $0x18] sm:$0xff]
  %v22 = vld [vmem:[%s2 + $0x20] sm:$0xff]
  %v23 = vld [vmem:[%s2 + $0x28] sm:$0xff]
  %v24 = vld [vmem:[%s2 + $0x30] sm:$0xff]
  %v25 = vld [vmem:[%s2 + $0x38] sm:$0xff]
  %v26 = vld [vmem:[%s2 + $0x40] sm:$0xff]
  %v27 = vld [vmem:[%s2 + $0x48] sm:$0xff]
  %v28 = vld [vmem:[%s2 + $0x50] sm:$0xff]
  %v29 = vld [vmem:[%s2 + $0x58] sm:$0xff]
  %v30 = vld [vmem:[%s2 + $0x60] sm:$0xff]
  %v31 = vld [vmem:[%s2 + $0x68] sm:$0xff]
  %v32 = vld [vmem:[%s2 + $0x70] sm:$0xff]
  %v33 = vld [vmem:[%s2 + $0x78] sm:$0xff]
  %v34 = vadd.f32 %v17, 0.0
  %vm35 = vcmask 1041408
  %v36 = vsel %vm35, %v34, 0.0
  %37 = vmatprep.subr.mxu0 0.0
  %38 = vmatpush1.msra.mxu0 %v18
  %39 = vmatprep.subr.mxu0 0.0
  %40 = vmatpush1.msra.mxu0 %v19
  %41 = vmatprep.subr.mxu0 0.0
  %42 = vmatpush1.msra.mxu0 %v20
  %43 = vmatprep.subr.mxu0 0.0
  %44 = vmatpush1.msra.mxu0 %v21
  %45 = vmatprep.subr.mxu0 0.0
  %46 = vmatpush1.msra.mxu0 %v22
  %47 = vmatprep.subr.mxu0 0.0
  %48 = vmatpush1.msra.mxu0 %v23
  %49 = vmatprep.subr.mxu0 0.0
  %50 = vmatpush1.msra.mxu0 %v24
  %51 = vmatprep.subr.mxu0 0.0
  %52 = vmatpush1.msra.mxu0 %v25
  %53 = vmatprep.subr.mxu0 0.0
  %54 = vmatpush1.msra.mxu0 %v26
  %55 = vmatprep.subr.mxu0 0.0
  %56 = vmatpush1.msra.mxu0 %v27
  %57 = vmatprep.subr.mxu0 0.0
  %58 = vmatpush1.msra.mxu0 %v28
  %59 = vmatprep.subr.mxu0 0.0
  %60 = vmatpush1.msra.mxu0 %v29
  %61 = vmatprep.subr.mxu0 0.0
  %62 = vmatpush1.msra.mxu0 %v30
  %63 = vmatprep.subr.mxu0 0.0
  %64 = vmatpush1.msra.mxu0 %v31
  %65 = vmatprep.subr.mxu0 0.0
  %66 = vmatpush1.msra.mxu0 %v32
  %67 = vmatprep.subr.mxu0 0.0
  %68 = vmatpush1.msra.mxu0 %v33
  %69 = vmatprep.subr.mxu0 0.0
  %70 = vmatpush1.msra.mxu0 0.0
  %71 = vmatprep.subr.mxu0 0.0
  %72 = vmatpush1.msra.mxu0 0.0
  %73 = vmatprep.subr.mxu0 0.0
  %74 = vmatpush1.msra.mxu0 0.0
  %75 = vmatprep.subr.mxu0 0.0
  %76 = vmatpush1.msra.mxu0 0.0
  %77 = vmatprep.subr.mxu0 0.0
  %78 = vmatpush1.msra.mxu0 0.0
  %79 = vmatprep.subr.mxu0 0.0
  %80 = vmatpush1.msra.mxu0 0.0
  %81 = vmatprep.subr.mxu0 0.0
  %82 = vmatpush1.msra.mxu0 0.0
  %83 = vmatprep.subr.mxu0 0.0
  %84 = vmatpush1.msra.mxu0 0.0
  %85 = vmatprep.subr.mxu0 0.0
  %86 = vmatpush1.msra.mxu0 0.0
  %87 = vmatprep.subr.mxu0 0.0
  %88 = vmatpush1.msra.mxu0 0.0
  %89 = vmatprep.subr.mxu0 0.0
  %90 = vmatpush1.msra.mxu0 0.0
  %91 = vmatprep.subr.mxu0 0.0
  %92 = vmatpush1.msra.mxu0 0.0
  %93 = vmatprep.subr.mxu0 0.0
  %94 = vmatpush1.msra.mxu0 0.0
  %95 = vmatprep.subr.mxu0 0.0
  %96 = vmatpush1.msra.mxu0 0.0
  %97 = vmatprep.subr.mxu0 0.0
  %98 = vmatpush1.msra.mxu0 0.0
  %99 = vmatprep.subr.mxu0 0.0
  %100 = vmatpush1.msra.mxu0 0.0
  %101 = vmatprep.mubr.f32.mxu0 0.0
  %102 = vmatmul.mubr.f32.gmra.mrb[0].mxu0 %v36
  %v103 = vpop.f32.mrb[0].mxu0
  %v104 = vadd.f32 0.0, %v103
  %v105 = vpop.f32.mrb[0].mxu0
  %106 = vdwg.mxu0
  %v107 = vrcp.pop 32.0
  %v108 = vmul.f32 %v104, %v107
  %v109 = vmul.f32 %v108, %v108
  %v111 = vrot.slane %v109, 7
  %v113 = vsub.f32 %v108, %v111
  %v114 = vmax.f32 %v113, 0.0
  %v115 = vadd.f32 %v114, 1e-05
  %v116 = vrsqrt.pop %v115
  %v117 = vmul.f32 %v115, %v116
  %vm118 = vcmp.eq.f32.partialorder %v115, inf
  %v119 = vsel %vm118, %v115, %v117
  %vm120 = vcmp.eq.f32.partialorder %v115, 0.0
  %v121 = vand.u32 %v115, 2147483648
  %v122 = vsel %vm120, %v121, %v119
  %v123 = vrcp.pop %v122
  %v124 = vmul.f32 1.0, %v123
  %v125 = vsub.f32 0.0, %v108
  %v127 = vrot.slane %v124, 1
  %v129 = vmul.f32 %v125, %v127
  %v130 = vld [vmem:[%s0] sm:$0xff]
  %v131 = vld [vmem:[%s0 + $0x8] sm:$0xff]
  %v132 = vld [vmem:[%s0 + $0x10] sm:$0xff]
  %v133 = vld [vmem:[%s0 + $0x18] sm:$0xff]
  %v134 = vlaneseq
  %v135 = vshrl.u32 %v134, 7
  %v136 = vsub.s32 1, %v135
  %v137 = vrot.slane %v124, %v136
  %v138 = vmul.f32 %v130, %v137
  %v139 = vmul.f32 %v131, %v137
  %v140 = vmul.f32 %v132, %v137
  %v141 = vmul.f32 %v133, %v137
  %v142 = vlaneseq
  %v143 = vshrl.u32 %v142, 7
  %v144 = vsub.s32 0, %v143
  %v145 = vrot.slane %v129, %v144
  %v146 = vadd.f32 %v138, %v145
  %v147 = vadd.f32 %v139, %v145
  %v148 = vadd.f32 %v140, %v145
  %v149 = vadd.f32 %v141, %v145
  %vm150 = vcmp.gt.f32.partialorder %v146, 0.0
  %vm151 = vcmp.gt.f32.partialorder %v147, 0.0
  %vm152 = vcmp.gt.f32.partialorder %v148, 0.0
  %vm153 = vcmp.gt.f32.partialorder %v149, 0.0
  %v154 = vmul.f32 %v146, 0.2
  %v155 = vmul.f32 %v147, 0.2
  %v156 = vmul.f32 %v148, 0.2
  %v157 = vmul.f32 %v149, 0.2
  %v158 = vsel %vm150, %v146, %v154
  %v159 = vsel %vm151, %v147, %v155
  %v160 = vsel %vm152, %v148, %v156
  %v161 = vsel %vm153, %v149, %v157
  %v162 = vld [vmem:[%s3] sm:$0x1]
  %v163 = vld [vmem:[%s3 + $0x1] sm:$0x1]
  %v164 = vld [vmem:[%s3 + $0x2] sm:$0x1]
  %v165 = vld [vmem:[%s3 + $0x3] sm:$0x1]
  %v170 = vlaneseq
  %v171 = vshrl.u32 %v170, 7
  %v172 = vsub.s32 0, %v171
  %v173 = vrot.slane %v162, %v172
  %v174 = vlaneseq
  %v175 = vshrl.u32 %v174, 7
  %v176 = vsub.s32 0, %v175
  %v177 = vrot.slane %v163, %v176
  %v178 = vlaneseq
  %v179 = vshrl.u32 %v178, 7
  %v180 = vsub.s32 0, %v179
  %v181 = vrot.slane %v164, %v180
  %v182 = vlaneseq
  %v183 = vshrl.u32 %v182, 7
  %v184 = vsub.s32 0, %v183
  %v185 = vrot.slane %v165, %v184
  %v190 = vmul.f32 %v158, %v173
  %v191 = vmul.f32 %v159, %v177
  %v192 = vmul.f32 %v160, %v181
  %v193 = vmul.f32 %v161, %v185
  %v194 = vadd.f32 %v190, %v191
  %v195 = vadd.f32 %v194, %v192
  %v196 = vadd.f32 %v195, %v193
  %197 = vadd.xlane.f32.xlu0 %v196
  %v198 = vpop.xlane.xlu0 %197
  %v199 = vand.u32 2147483647, %v198
  %v200 = vsub.f32 0.0, %v199
  %v201 = vmul.f32 %v200, 1.442695
  %v202 = vpow.pop %v201
  %vm203 = vcmp.ge.f32.partialorder %v198, 0.0
  %v204 = vadd.f32 %v202, 1.0
  %v205 = vrcp.pop %v204
  %v206 = vmul.f32 1.0, %v205
  %v207 = vmul.f32 %v202, %v205
  %v208 = vsel %vm203, %v206, %v207
  %vm209 = vcmask 7168
  %210 = vst.msk [vmem:[%s4] sm:$0xff] %vm209, %v208
  // Predicated region
  $region18: #{disc_forward.5} parent=0 // pred_check
    _
  $region19: #{disc_forward.5} parent=0 // pred_check_branch
    %212 = sbr.rel (0) target = $region21
  $region20: #{disc_forward.5} parent=0 // pred_region
    _
  $region21: #{disc_forward.5} parent=0 // pred_fallthru
    _
  // Predicated region
  $region22: #{disc_forward.5} parent=0 // pred_check
    _
  $region23: #{disc_forward.5} parent=0 // pred_check_branch
    %214 = sbr.rel (0) target = $region25
  $region24: #{disc_forward.5} parent=0 // pred_region
    _
  $region25: #{disc_forward.5} parent=0 // pred_fallthru
    _

</llo_original>
